<compile_context>
chip_gen: v7x
topology: tpu7x:2x2x1
jax: 0.10.0
libtpu: 0.0.40
codegen_flags: <defaults>
</compile_context>

<pallas_src>
import math
import functools

import jax
import jax.numpy as jnp
from jax.experimental import pallas as pl
from jax.experimental.pallas import tpu as pltpu

BN_EPS = 1e-5
L2_EPS = 1e-12
_STATS_LANES = 128  # lane-dense scalar output slab width
_LANE = 128         # feature-dim padding multiple


# ---------------------------------------------------------------------------
# Kernel body
# ---------------------------------------------------------------------------
def _project(x, w1, b1, w2, b2):
    """Linear -> BN(batch stats) -> ReLU -> [Dropout=id] -> Linear -> BN -> L2.

    x/w1/w2 are bf16 (MXU operands); accumulation and all pointwise math f32.
    """
    h = jnp.dot(x, w1, preferred_element_type=jnp.float32) + b1        # (B,H) f32
    mu1 = jnp.mean(h, axis=0, keepdims=True)
    hc = h - mu1                                                        # reused
    var1 = jnp.mean(hc * hc, axis=0, keepdims=True)
    h = jnp.maximum(hc * jax.lax.rsqrt(var1 + BN_EPS), 0.0)             # BN + ReLU
    # Dropout = identity (see TODO at top of file).

    z = jnp.dot(h.astype(jnp.bfloat16), w2,
                preferred_element_type=jnp.float32) + b2                # (B,P) f32
    mu2 = jnp.mean(z, axis=0, keepdims=True)
    zc = z - mu2
    var2 = jnp.mean(zc * zc, axis=0, keepdims=True)
    z = zc * jax.lax.rsqrt(var2 + BN_EPS)

    # F.normalize(p=2, dim=1): z / max(||z||, eps) == z * rsqrt(max(||z||^2, eps^2))
    ss = jnp.sum(z * z, axis=1, keepdims=True)
    return z * jax.lax.rsqrt(jnp.maximum(ss, L2_EPS * L2_EPS))


def _fused_head_kernel(prod_ref, syn_ref,
                       pw1_ref, pb1_ref, pw2_ref, pb2_ref,
                       sw1_ref, sb1_ref, sw2_ref, sb2_ref,
                       stats_ref, *, temperature):
    p = _project(prod_ref[...], pw1_ref[...], pb1_ref[...], pw2_ref[...], pb2_ref[...])
    s = _project(syn_ref[...], sw1_ref[...], sb1_ref[...], sw2_ref[...], sb2_ref[...])
    B = p.shape[0]

    # Fold 1/temperature into the (B,P) operand (one multiply instead of a
    # (B,B) divide).  sim = (p @ s.T) / T without transposing s.
    p_scaled = p * (1.0 / temperature)
    sim = jax.lax.dot_general(p_scaled, s, (((1,), (1,)), ((), ())),
                              preferred_element_type=jnp.float32)       # (B,B) f32

    # Exact diagonal of sim in both layouts (eye mask + MXU matvecs; no
    # transposes, and ulp-exact vs the row/col maxes for the accuracy test).
    eye = (jax.lax.broadcasted_iota(jnp.int32, (B, B), 0)
           == jax.lax.broadcasted_iota(jnp.int32, (B, B), 1))
    sim_diag = jnp.where(eye, sim, 0.0)

    ones_col = jnp.ones((B, 1), jnp.float32)
    ones_row = jnp.ones((1, B), jnp.float32)

    # Single un-shifted exp pass: p, s are unit-norm so |sim| <= 1/T (~14.3);
    # exp(sim) in [6e-7, 1.6e6] is safe in f32.  Row/col sums go to the MXU
    # (idle after the sim matmul) instead of the XLU.
    e = jnp.exp(sim)
    row_sum = jnp.dot(e, ones_col, preferred_element_type=jnp.float32)         # (B,1)
    col_sum = jnp.dot(ones_row, e, preferred_element_type=jnp.float32)         # (1,B)
    diag_col = jnp.dot(sim_diag, ones_col, preferred_element_type=jnp.float32)  # (B,1)
    diag_row = jnp.dot(ones_row, sim_diag, preferred_element_type=jnp.float32)  # (1,B)

    lse_row = jnp.log(row_sum)   # (B,1) product -> synthon
    lse_col = jnp.log(col_sum)   # (1,B) synthon -> product

    loss11 = (jnp.sum(lse_row, axis=0, keepdims=True)
              + jnp.sum(lse_col, axis=1, keepdims=True)
              - 2.0 * jnp.sum(diag_col, axis=0, keepdims=True)) * (0.5 / B)    # (1,1)

    # Top-1 accuracy: the positive pair is correct iff the diagonal entry
    # attains the row/col max (== torch argmax except on exact float ties).
    m_row = jnp.max(sim, axis=1, keepdims=True)   # (B,1)
    m_col = jnp.max(sim, axis=0, keepdims=True)   # (1,B)
    acc11 = (jnp.sum((diag_col >= m_row).astype(jnp.float32), axis=0, keepdims=True)
             + jnp.sum((diag_row >= m_col).astype(jnp.float32), axis=1, keepdims=True)
             ) * (0.5 / B)                                                      # (1,1)

    # Pack both scalars into one lane-dense (1, 128) slab (lane 0 = loss,
    # lane 1 = accuracy) -> single output DMA.
    lane = jax.lax.broadcasted_iota(jnp.int32, (1, _STATS_LANES), 1)
    stats_ref[...] = jnp.where(lane == 0, loss11,
                               jnp.where(lane == 1, acc11, 0.0))


# ---------------------------------------------------------------------------
# Wrapper: pad to TPU-friendly shapes, cast matmul operands to bf16, one call
# ---------------------------------------------------------------------------
def _pad_axis(x, axis, multiple):
    pad = (-x.shape[axis]) % multiple
    if pad == 0:
        return x
    widths = [(0, 0)] * x.ndim
    widths[axis] = (0, pad)
    return jnp.pad(x, widths)


def _prepare_operands(params, product_embeddings, synthon_embeddings):
    """Zero-pad feature dims to multiples of 128 (a mathematical no-op: extra
    rows/cols are zero and BatchNorm of an all-zero column stays zero) and
    cast matmul operands to bf16.  Biases stay f32."""
    def mat(w):   # pad both dims, bf16
        return _pad_axis(_pad_axis(w, 0, _LANE), 1, _LANE).astype(jnp.bfloat16)

    def vec(b):   # pad lane dim, keep f32
        return _pad_axis(b, 1, _LANE)

    prod = _pad_axis(product_embeddings, 1, _LANE).astype(jnp.bfloat16)
    syn = _pad_axis(synthon_embeddings, 1, _LANE).astype(jnp.bfloat16)
    return (prod, syn,
            mat(params["p_w1"]), vec(params["p_b1"]), mat(params["p_w2"]), vec(params["p_b2"]),
            mat(params["s_w1"]), vec(params["s_b1"]), mat(params["s_w2"]), vec(params["s_b2"]))


def product_synthon_contrastive_forward(params, product_embeddings,
                                        synthon_embeddings, temperature=0.07):
    operands = _prepare_operands(params, product_embeddings, synthon_embeddings)
    prod, syn, pw1, pb1, pw2, pb2, sw1, sb1, sw2, sb2 = operands
    B, Dp = prod.shape
    Ds = syn.shape[1]
    H = pw1.shape[1]
    P = pw2.shape[1]

    kernel = functools.partial(_fused_head_kernel, temperature=float(temperature))

    # Real working set: bf16 matmul operands + f32 biases + f32 intermediates
    # (h, two z's, sim, exp(sim), stats slab).  Explicit VMEM limit, clamped to
    # 64 MiB so the same config stays inside v7x's physical VMEM.
    ws_bytes = (2 * (prod.size + syn.size + pw1.size + sw1.size + pw2.size + sw2.size)
                + 4 * (pb1.size + pb2.size + sb1.size + sb2.size)
                + 4 * (2 * B * H + 4 * B * P + 3 * B * B + _STATS_LANES))
    vmem_limit = int(min(max(2 * ws_bytes + (1 << 20), 16 << 20), 64 << 20))

    flops = (2 * B * Dp * H + 2 * B * Ds * H + 4 * B * H * P    # four Linear matmuls
             + 2 * B * B * P + 8 * B * B                        # sim matmul + 4 matvecs
             + 20 * B * (H + P) + 10 * B * B)                   # BN / norm / compare VPU work
    transcendentals = B * B + 4 * B + 2 * (H + P)               # exp / log / rsqrt
    bytes_accessed = (2 * (B * Dp + B * Ds + Dp * H + Ds * H + 2 * H * P)
                      + 4 * (2 * H + 2 * P) + 4 * _STATS_LANES)

    vmem_spec = pl.BlockSpec(memory_space=pltpu.MemorySpace.VMEM)

    stats = pl.pallas_call(
        kernel,
        in_specs=[vmem_spec] * 10,          # whole-array VMEM, no grid, no dead pipeline buffers
        out_specs=vmem_spec,
        out_shape=jax.ShapeDtypeStruct((1, _STATS_LANES), jnp.float32),
        compiler_params=pltpu.CompilerParams(vmem_limit_bytes=vmem_limit),
        cost_estimate=pl.CostEstimate(flops=flops,
                                      transcendentals=transcendentals,
                                      bytes_accessed=bytes_accessed),
    )(*operands)

    return stats[0, 0], stats[0, 1]


# ---------------------------------------------------------------------------
# Parameter init (Kaiming-normal fan_out/relu for Linear weights, zero biases)
# Weights stored transposed vs PyTorch: (in_features, out_features).
# ---------------------------------------------------------------------------
def init_params(key, product_dim, synthon_dim, hidden_dim, projection_dim):
    ks = jax.random.split(key, 4)

    def kaiming(k, d_in, d_out):
        std = math.sqrt(2.0 / d_out)  # fan_out of a PyTorch Linear = out_features
        return jax.random.normal(k, (d_in, d_out), dtype=jnp.float32) * std

    return {
        "p_w1": kaiming(ks[0], product_dim, hidden_dim),
        "p_b1": jnp.zeros((1, hidden_dim), jnp.float32),
        "p_w2": kaiming(ks[1], hidden_dim, projection_dim),
        "p_b2": jnp.zeros((1, projection_dim), jnp.float32),
        "s_w1": kaiming(ks[2], synthon_dim, hidden_dim),
        "s_b1": jnp.zeros((1, hidden_dim), jnp.float32),
        "s_w2": kaiming(ks[3], hidden_dim, projection_dim),
        "s_b2": jnp.zeros((1, projection_dim), jnp.float32),
    }


# ---------------------------------------------------------------------------
# Pure-JAX reference (sanity check only) — uses the SAME bf16-cast operands so
# the comparison differs only by f32 accumulation order, not operand rounding.
# ---------------------------------------------------------------------------
def _reference_forward(operands, temperature=0.07):
    prod, syn, pw1, pb1, pw2, pb2, sw1, sb1, sw2, sb2 = operands

    def proj(x, w1, b1, w2, b2):
        h = jnp.dot(x, w1, preferred_element_type=jnp.float32) + b1
        mu = h.mean(0, keepdims=True)
        hc = h - mu
        var = (hc * hc).mean(0, keepdims=True)
        h = jnp.maximum(hc * jax.lax.rsqrt(var + BN_EPS), 0.0)
        z = jnp.dot(h.astype(jnp.bfloat16), w2, preferred_element_type=jnp.float32) + b2
        mu2 = z.mean(0, keepdims=True)
        zc = z - mu2
        var2 = (zc * zc).mean(0, keepdims=True)
        z = zc * jax.lax.rsqrt(var2 + BN_EPS)
        nrm = jnp.maximum(jnp.linalg.norm(z, axis=1, keepdims=True), L2_EPS)
        return z / nrm

    p = proj(prod, pw1, pb1, pw2, pb2)
    s = proj(syn, sw1, sb1, sw2, sb2)
    sim = jnp.dot(p, s.T, preferred_element_type=jnp.float32) / temperature
    B = sim.shape[0]
    labels = jnp.arange(B)
    lse_r = jax.scipy.special.logsumexp(sim, axis=1)
    lse_c = jax.scipy.special.logsumexp(sim, axis=0)
    diag = jnp.diag(sim)
    loss = (jnp.mean(lse_r - diag) + jnp.mean(lse_c - diag)) / 2.0
    acc = (jnp.mean((jnp.argmax(sim, axis=1) == labels).astype(jnp.float32))
           + jnp.mean((jnp.argmax(sim, axis=0) == labels).astype(jnp.float32))) / 2.0
    return loss, acc


if __name__ == "__main__":
    # Small shapes consistent with the module (scaled-down dims, TPU-aligned).
    BATCH = 8
    PRODUCT_DIM = 128
    SYNTHON_DIM = 128
    HIDDEN_DIM = 256
    PROJECTION_DIM = 128
    TEMPERATURE = 0.07

    key = jax.random.PRNGKey(0)
    k_param, k_prod, k_syn = jax.random.split(key, 3)

    params = init_params(k_param, PRODUCT_DIM, SYNTHON_DIM, HIDDEN_DIM, PROJECTION_DIM)
    product_embeddings = jax.random.normal(k_prod, (BATCH, PRODUCT_DIM), jnp.float32)
    synthon_embeddings = jax.random.normal(k_syn, (BATCH, SYNTHON_DIM), jnp.float32)

    loss, acc = product_synthon_contrastive_forward(
        params, product_embeddings, synthon_embeddings, TEMPERATURE)
    loss = jax.block_until_ready(loss)
    acc = jax.block_until_ready(acc)

    # Sanity check against a plain-JAX reference using identical bf16 operands.
    ref_loss, ref_acc = _reference_forward(
        _prepare_operands(params, product_embeddings, synthon_embeddings), TEMPERATURE)
    assert jnp.allclose(loss, ref_loss, rtol=2e-3, atol=2e-3), (loss, ref_loss)
    assert jnp.allclose(acc, ref_acc, rtol=1e-5, atol=1e-5), (acc, ref_acc)

    print("KERNEL_OK")
</pallas_src>

<mosaic_0001>
module attributes {stable_mosaic.version = 11 : i64} {
  func.func @_fused_head_kernel(%arg0: memref<8x128xbf16, #tpu.memory_space<vmem>>, %arg1: memref<8x128xbf16, #tpu.memory_space<vmem>>, %arg2: memref<128x256xbf16, #tpu.memory_space<vmem>>, %arg3: memref<1x256xf32, #tpu.memory_space<vmem>>, %arg4: memref<256x128xbf16, #tpu.memory_space<vmem>>, %arg5: memref<1x128xf32, #tpu.memory_space<vmem>>, %arg6: memref<128x256xbf16, #tpu.memory_space<vmem>>, %arg7: memref<1x256xf32, #tpu.memory_space<vmem>>, %arg8: memref<256x128xbf16, #tpu.memory_space<vmem>>, %arg9: memref<1x128xf32, #tpu.memory_space<vmem>>, %arg10: memref<1x128xf32, #tpu.memory_space<vmem>>) attributes {dimension_semantics = [], scalar_prefetch = 0 : i64, scratch_operands = 0 : i64, tpu.core_type = #tpu.core_type<tc>} {
    %c0 = arith.constant 0 : index
    %c0_0 = arith.constant 0 : index
    %0 = vector.load %arg0[%c0, %c0_0] : memref<8x128xbf16, #tpu.memory_space<vmem>>, vector<8x128xbf16>
    %c0_1 = arith.constant 0 : index
    %c0_2 = arith.constant 0 : index
    %1 = vector.load %arg2[%c0_1, %c0_2] : memref<128x256xbf16, #tpu.memory_space<vmem>>, vector<128x256xbf16>
    %c0_3 = arith.constant 0 : index
    %c0_4 = arith.constant 0 : index
    %2 = vector.load %arg3[%c0_3, %c0_4] : memref<1x256xf32, #tpu.memory_space<vmem>>, vector<1x256xf32>
    %c0_5 = arith.constant 0 : index
    %c0_6 = arith.constant 0 : index
    %3 = vector.load %arg4[%c0_5, %c0_6] : memref<256x128xbf16, #tpu.memory_space<vmem>>, vector<256x128xbf16>
    %c0_7 = arith.constant 0 : index
    %c0_8 = arith.constant 0 : index
    %4 = vector.load %arg5[%c0_7, %c0_8] : memref<1x128xf32, #tpu.memory_space<vmem>>, vector<1x128xf32>
    %cst = arith.constant dense<0.000000e+00> : vector<8x256xf32>
    %5 = tpu.matmul %0, %1, %cst {dimension_numbers = #tpu.dot_dimension_numbers<[1], [0], [0], [1], [0, 0, 1, 1], [], []>} : vector<8x128xbf16>, vector<128x256xbf16>, vector<8x256xf32> -> vector<8x256xf32>
    %6 = vector.broadcast %2 : vector<1x256xf32> to vector<8x256xf32>
    %7 = arith.addf %5, %6 : vector<8x256xf32>
    %cst_9 = arith.constant dense<0.000000e+00> : vector<256xf32>
    %8 = vector.multi_reduction <add>, %7, %cst_9 [0] : vector<8x256xf32> to vector<256xf32>
    %9 = vector.shape_cast %8 : vector<256xf32> to vector<1x256xf32>
    %cst_10 = arith.constant 8.000000e+00 : f32
    %10 = vector.broadcast %cst_10 : f32 to vector<1x256xf32>
    %11 = arith.divf %9, %10 : vector<1x256xf32>
    %12 = vector.broadcast %11 : vector<1x256xf32> to vector<8x256xf32>
    %13 = arith.subf %7, %12 : vector<8x256xf32>
    %14 = arith.mulf %13, %13 : vector<8x256xf32>
    %cst_11 = arith.constant dense<0.000000e+00> : vector<256xf32>
    %15 = vector.multi_reduction <add>, %14, %cst_11 [0] : vector<8x256xf32> to vector<256xf32>
    %16 = vector.shape_cast %15 : vector<256xf32> to vector<1x256xf32>
    %cst_12 = arith.constant 8.000000e+00 : f32
    %17 = vector.broadcast %cst_12 : f32 to vector<1x256xf32>
    %18 = arith.divf %16, %17 : vector<1x256xf32>
    %cst_13 = arith.constant 9.99999974E-6 : f32
    %19 = vector.broadcast %cst_13 : f32 to vector<1x256xf32>
    %20 = arith.addf %18, %19 : vector<1x256xf32>
    %21 = math.rsqrt %20 : vector<1x256xf32>
    %22 = vector.broadcast %21 : vector<1x256xf32> to vector<8x256xf32>
    %23 = arith.mulf %13, %22 : vector<8x256xf32>
    %cst_14 = arith.constant 0.000000e+00 : f32
    %24 = vector.broadcast %cst_14 : f32 to vector<8x256xf32>
    %25 = arith.maximumf %23, %24 : vector<8x256xf32>
    %26 = arith.truncf %25 : vector<8x256xf32> to vector<8x256xbf16>
    %cst_15 = arith.constant dense<0.000000e+00> : vector<8x128xf32>
    %27 = tpu.matmul %26, %3, %cst_15 {dimension_numbers = #tpu.dot_dimension_numbers<[1], [0], [0], [1], [0, 0, 1, 1], [], []>} : vector<8x256xbf16>, vector<256x128xbf16>, vector<8x128xf32> -> vector<8x128xf32>
    %28 = vector.broadcast %4 : vector<1x128xf32> to vector<8x128xf32>
    %29 = arith.addf %27, %28 : vector<8x128xf32>
    %cst_16 = arith.constant dense<0.000000e+00> : vector<128xf32>
    %30 = vector.multi_reduction <add>, %29, %cst_16 [0] : vector<8x128xf32> to vector<128xf32>
    %31 = vector.shape_cast %30 : vector<128xf32> to vector<1x128xf32>
    %cst_17 = arith.constant 8.000000e+00 : f32
    %32 = vector.broadcast %cst_17 : f32 to vector<1x128xf32>
    %33 = arith.divf %31, %32 : vector<1x128xf32>
    %34 = vector.broadcast %33 : vector<1x128xf32> to vector<8x128xf32>
    %35 = arith.subf %29, %34 : vector<8x128xf32>
    %36 = arith.mulf %35, %35 : vector<8x128xf32>
    %cst_18 = arith.constant dense<0.000000e+00> : vector<128xf32>
    %37 = vector.multi_reduction <add>, %36, %cst_18 [0] : vector<8x128xf32> to vector<128xf32>
    %38 = vector.shape_cast %37 : vector<128xf32> to vector<1x128xf32>
    %cst_19 = arith.constant 8.000000e+00 : f32
    %39 = vector.broadcast %cst_19 : f32 to vector<1x128xf32>
    %40 = arith.divf %38, %39 : vector<1x128xf32>
    %cst_20 = arith.constant 9.99999974E-6 : f32
    %41 = vector.broadcast %cst_20 : f32 to vector<1x128xf32>
    %42 = arith.addf %40, %41 : vector<1x128xf32>
    %43 = math.rsqrt %42 : vector<1x128xf32>
    %44 = vector.broadcast %43 : vector<1x128xf32> to vector<8x128xf32>
    %45 = arith.mulf %35, %44 : vector<8x128xf32>
    %46 = arith.mulf %45, %45 : vector<8x128xf32>
    %cst_21 = arith.constant dense<0.000000e+00> : vector<8xf32>
    %47 = vector.multi_reduction <add>, %46, %cst_21 [1] : vector<8x128xf32> to vector<8xf32>
    %48 = vector.shape_cast %47 : vector<8xf32> to vector<8x1xf32>
    %cst_22 = arith.constant 1.000000e-24 : f32
    %49 = vector.broadcast %cst_22 : f32 to vector<8x1xf32>
    %50 = arith.maximumf %48, %49 : vector<8x1xf32>
    %51 = math.rsqrt %50 : vector<8x1xf32>
    %52 = vector.broadcast %51 : vector<8x1xf32> to vector<8x128xf32>
    %53 = arith.mulf %45, %52 : vector<8x128xf32>
    %c0_23 = arith.constant 0 : index
    %c0_24 = arith.constant 0 : index
    %54 = vector.load %arg1[%c0_23, %c0_24] : memref<8x128xbf16, #tpu.memory_space<vmem>>, vector<8x128xbf16>
    %c0_25 = arith.constant 0 : index
    %c0_26 = arith.constant 0 : index
    %55 = vector.load %arg6[%c0_25, %c0_26] : memref<128x256xbf16, #tpu.memory_space<vmem>>, vector<128x256xbf16>
    %c0_27 = arith.constant 0 : index
    %c0_28 = arith.constant 0 : index
    %56 = vector.load %arg7[%c0_27, %c0_28] : memref<1x256xf32, #tpu.memory_space<vmem>>, vector<1x256xf32>
    %c0_29 = arith.constant 0 : index
    %c0_30 = arith.constant 0 : index
    %57 = vector.load %arg8[%c0_29, %c0_30] : memref<256x128xbf16, #tpu.memory_space<vmem>>, vector<256x128xbf16>
    %c0_31 = arith.constant 0 : index
    %c0_32 = arith.constant 0 : index
    %58 = vector.load %arg9[%c0_31, %c0_32] : memref<1x128xf32, #tpu.memory_space<vmem>>, vector<1x128xf32>
    %cst_33 = arith.constant dense<0.000000e+00> : vector<8x256xf32>
    %59 = tpu.matmul %54, %55, %cst_33 {dimension_numbers = #tpu.dot_dimension_numbers<[1], [0], [0], [1], [0, 0, 1, 1], [], []>} : vector<8x128xbf16>, vector<128x256xbf16>, vector<8x256xf32> -> vector<8x256xf32>
    %60 = vector.broadcast %56 : vector<1x256xf32> to vector<8x256xf32>
    %61 = arith.addf %59, %60 : vector<8x256xf32>
    %cst_34 = arith.constant dense<0.000000e+00> : vector<256xf32>
    %62 = vector.multi_reduction <add>, %61, %cst_34 [0] : vector<8x256xf32> to vector<256xf32>
    %63 = vector.shape_cast %62 : vector<256xf32> to vector<1x256xf32>
    %cst_35 = arith.constant 8.000000e+00 : f32
    %64 = vector.broadcast %cst_35 : f32 to vector<1x256xf32>
    %65 = arith.divf %63, %64 : vector<1x256xf32>
    %66 = vector.broadcast %65 : vector<1x256xf32> to vector<8x256xf32>
    %67 = arith.subf %61, %66 : vector<8x256xf32>
    %68 = arith.mulf %67, %67 : vector<8x256xf32>
    %cst_36 = arith.constant dense<0.000000e+00> : vector<256xf32>
    %69 = vector.multi_reduction <add>, %68, %cst_36 [0] : vector<8x256xf32> to vector<256xf32>
    %70 = vector.shape_cast %69 : vector<256xf32> to vector<1x256xf32>
    %cst_37 = arith.constant 8.000000e+00 : f32
    %71 = vector.broadcast %cst_37 : f32 to vector<1x256xf32>
    %72 = arith.divf %70, %71 : vector<1x256xf32>
    %cst_38 = arith.constant 9.99999974E-6 : f32
    %73 = vector.broadcast %cst_38 : f32 to vector<1x256xf32>
    %74 = arith.addf %72, %73 : vector<1x256xf32>
    %75 = math.rsqrt %74 : vector<1x256xf32>
    %76 = vector.broadcast %75 : vector<1x256xf32> to vector<8x256xf32>
    %77 = arith.mulf %67, %76 : vector<8x256xf32>
    %cst_39 = arith.constant 0.000000e+00 : f32
    %78 = vector.broadcast %cst_39 : f32 to vector<8x256xf32>
    %79 = arith.maximumf %77, %78 : vector<8x256xf32>
    %80 = arith.truncf %79 : vector<8x256xf32> to vector<8x256xbf16>
    %cst_40 = arith.constant dense<0.000000e+00> : vector<8x128xf32>
    %81 = tpu.matmul %80, %57, %cst_40 {dimension_numbers = #tpu.dot_dimension_numbers<[1], [0], [0], [1], [0, 0, 1, 1], [], []>} : vector<8x256xbf16>, vector<256x128xbf16>, vector<8x128xf32> -> vector<8x128xf32>
    %82 = vector.broadcast %58 : vector<1x128xf32> to vector<8x128xf32>
    %83 = arith.addf %81, %82 : vector<8x128xf32>
    %cst_41 = arith.constant dense<0.000000e+00> : vector<128xf32>
    %84 = vector.multi_reduction <add>, %83, %cst_41 [0] : vector<8x128xf32> to vector<128xf32>
    %85 = vector.shape_cast %84 : vector<128xf32> to vector<1x128xf32>
    %cst_42 = arith.constant 8.000000e+00 : f32
    %86 = vector.broadcast %cst_42 : f32 to vector<1x128xf32>
    %87 = arith.divf %85, %86 : vector<1x128xf32>
    %88 = vector.broadcast %87 : vector<1x128xf32> to vector<8x128xf32>
    %89 = arith.subf %83, %88 : vector<8x128xf32>
    %90 = arith.mulf %89, %89 : vector<8x128xf32>
    %cst_43 = arith.constant dense<0.000000e+00> : vector<128xf32>
    %91 = vector.multi_reduction <add>, %90, %cst_43 [0] : vector<8x128xf32> to vector<128xf32>
    %92 = vector.shape_cast %91 : vector<128xf32> to vector<1x128xf32>
    %cst_44 = arith.constant 8.000000e+00 : f32
    %93 = vector.broadcast %cst_44 : f32 to vector<1x128xf32>
    %94 = arith.divf %92, %93 : vector<1x128xf32>
    %cst_45 = arith.constant 9.99999974E-6 : f32
    %95 = vector.broadcast %cst_45 : f32 to vector<1x128xf32>
    %96 = arith.addf %94, %95 : vector<1x128xf32>
    %97 = math.rsqrt %96 : vector<1x128xf32>
    %98 = vector.broadcast %97 : vector<1x128xf32> to vector<8x128xf32>
    %99 = arith.mulf %89, %98 : vector<8x128xf32>
    %100 = arith.mulf %99, %99 : vector<8x128xf32>
    %cst_46 = arith.constant dense<0.000000e+00> : vector<8xf32>
    %101 = vector.multi_reduction <add>, %100, %cst_46 [1] : vector<8x128xf32> to vector<8xf32>
    %102 = vector.shape_cast %101 : vector<8xf32> to vector<8x1xf32>
    %cst_47 = arith.constant 1.000000e-24 : f32
    %103 = vector.broadcast %cst_47 : f32 to vector<8x1xf32>
    %104 = arith.maximumf %102, %103 : vector<8x1xf32>
    %105 = math.rsqrt %104 : vector<8x1xf32>
    %106 = vector.broadcast %105 : vector<8x1xf32> to vector<8x128xf32>
    %107 = arith.mulf %99, %106 : vector<8x128xf32>
    %cst_48 = arith.constant 14.2857141 : f32
    %108 = vector.broadcast %cst_48 : f32 to vector<8x128xf32>
    %109 = arith.mulf %53, %108 : vector<8x128xf32>
    %cst_49 = arith.constant dense<0.000000e+00> : vector<8x8xf32>
    %110 = tpu.matmul %109, %107, %cst_49 {dimension_numbers = #tpu.dot_dimension_numbers<[1], [1], [0], [0], [0, 0, 1, 0], [], []>} : vector<8x128xf32>, vector<8x128xf32>, vector<8x8xf32> -> vector<8x8xf32>
    %111 = tpu.iota {dimensions = array<i32: 0>} : vector<8x8xi32>
    %112 = tpu.iota {dimensions = array<i32: 1>} : vector<8x8xi32>
    %113 = arith.cmpi eq, %111, %112 : vector<8x8xi32>
    %cst_50 = arith.constant 0.000000e+00 : f32
    %114 = vector.broadcast %cst_50 : f32 to vector<8x8xf32>
    %115 = arith.select %113, %110, %114 : vector<8x8xi1>, vector<8x8xf32>
    %cst_51 = arith.constant 1.000000e+00 : f32
    %116 = vector.broadcast %cst_51 : f32 to vector<8x1xf32>
    %cst_52 = arith.constant 1.000000e+00 : f32
    %117 = vector.broadcast %cst_52 : f32 to vector<1x8xf32>
    %118 = math.exp %110 : vector<8x8xf32>
    %cst_53 = arith.constant dense<0.000000e+00> : vector<8x1xf32>
    %119 = tpu.matmul %118, %116, %cst_53 {dimension_numbers = #tpu.dot_dimension_numbers<[1], [0], [0], [1], [0, 0, 1, 1], [], []>} : vector<8x8xf32>, vector<8x1xf32>, vector<8x1xf32> -> vector<8x1xf32>
    %cst_54 = arith.constant dense<0.000000e+00> : vector<1x8xf32>
    %120 = tpu.matmul %117, %118, %cst_54 {dimension_numbers = #tpu.dot_dimension_numbers<[1], [0], [0], [1], [0, 0, 1, 1], [], []>} : vector<1x8xf32>, vector<8x8xf32>, vector<1x8xf32> -> vector<1x8xf32>
    %cst_55 = arith.constant dense<0.000000e+00> : vector<8x1xf32>
    %121 = tpu.matmul %115, %116, %cst_55 {dimension_numbers = #tpu.dot_dimension_numbers<[1], [0], [0], [1], [0, 0, 1, 1], [], []>} : vector<8x8xf32>, vector<8x1xf32>, vector<8x1xf32> -> vector<8x1xf32>
    %cst_56 = arith.constant dense<0.000000e+00> : vector<1x8xf32>
    %122 = tpu.matmul %117, %115, %cst_56 {dimension_numbers = #tpu.dot_dimension_numbers<[1], [0], [0], [1], [0, 0, 1, 1], [], []>} : vector<1x8xf32>, vector<8x8xf32>, vector<1x8xf32> -> vector<1x8xf32>
    %123 = math.log %119 : vector<8x1xf32>
    %124 = math.log %120 : vector<1x8xf32>
    %cst_57 = arith.constant dense<0.000000e+00> : vector<1xf32>
    %125 = vector.multi_reduction <add>, %123, %cst_57 [0] : vector<8x1xf32> to vector<1xf32>
    %126 = vector.shape_cast %125 : vector<1xf32> to vector<1x1xf32>
    %cst_58 = arith.constant dense<0.000000e+00> : vector<1xf32>
    %127 = vector.multi_reduction <add>, %124, %cst_58 [1] : vector<1x8xf32> to vector<1xf32>
    %128 = vector.shape_cast %127 : vector<1xf32> to vector<1x1xf32>
    %129 = arith.addf %126, %128 : vector<1x1xf32>
    %cst_59 = arith.constant dense<0.000000e+00> : vector<1xf32>
    %130 = vector.multi_reduction <add>, %121, %cst_59 [0] : vector<8x1xf32> to vector<1xf32>
    %131 = vector.shape_cast %130 : vector<1xf32> to vector<1x1xf32>
    %cst_60 = arith.constant 2.000000e+00 : f32
    %132 = vector.broadcast %cst_60 : f32 to vector<1x1xf32>
    %133 = arith.mulf %132, %131 : vector<1x1xf32>
    %134 = arith.subf %129, %133 : vector<1x1xf32>
    %cst_61 = arith.constant 6.250000e-02 : f32
    %135 = vector.broadcast %cst_61 : f32 to vector<1x1xf32>
    %136 = arith.mulf %134, %135 : vector<1x1xf32>
    %cst_62 = arith.constant dense<0xFF800000> : vector<8xf32>
    %137 = vector.multi_reduction <maximumf>, %110, %cst_62 [1] : vector<8x8xf32> to vector<8xf32>
    %138 = vector.shape_cast %137 : vector<8xf32> to vector<8x1xf32>
    %cst_63 = arith.constant dense<0xFF800000> : vector<8xf32>
    %139 = vector.multi_reduction <maximumf>, %110, %cst_63 [0] : vector<8x8xf32> to vector<8xf32>
    %140 = vector.shape_cast %139 : vector<8xf32> to vector<1x8xf32>
    %141 = arith.cmpf oge, %121, %138 : vector<8x1xf32>
    %142 = arith.extui %141 : vector<8x1xi1> to vector<8x1xi32>
    %143 = arith.sitofp %142 : vector<8x1xi32> to vector<8x1xf32>
    %cst_64 = arith.constant dense<0.000000e+00> : vector<1xf32>
    %144 = vector.multi_reduction <add>, %143, %cst_64 [0] : vector<8x1xf32> to vector<1xf32>
    %145 = vector.shape_cast %144 : vector<1xf32> to vector<1x1xf32>
    %146 = arith.cmpf oge, %122, %140 : vector<1x8xf32>
    %147 = arith.extui %146 : vector<1x8xi1> to vector<1x8xi32>
    %148 = arith.sitofp %147 : vector<1x8xi32> to vector<1x8xf32>
    %cst_65 = arith.constant dense<0.000000e+00> : vector<1xf32>
    %149 = vector.multi_reduction <add>, %148, %cst_65 [1] : vector<1x8xf32> to vector<1xf32>
    %150 = vector.shape_cast %149 : vector<1xf32> to vector<1x1xf32>
    %151 = arith.addf %145, %150 : vector<1x1xf32>
    %cst_66 = arith.constant 6.250000e-02 : f32
    %152 = vector.broadcast %cst_66 : f32 to vector<1x1xf32>
    %153 = arith.mulf %151, %152 : vector<1x1xf32>
    %154 = tpu.iota {dimensions = array<i32: 1>} : vector<1x128xi32>
    %c0_i32 = arith.constant 0 : i32
    %155 = vector.broadcast %c0_i32 : i32 to vector<1x128xi32>
    %156 = arith.cmpi eq, %154, %155 : vector<1x128xi32>
    %c1_i32 = arith.constant 1 : i32
    %157 = vector.broadcast %c1_i32 : i32 to vector<1x128xi32>
    %158 = arith.cmpi eq, %154, %157 : vector<1x128xi32>
    %cst_67 = arith.constant 0.000000e+00 : f32
    %159 = vector.shape_cast %153 : vector<1x1xf32> to vector<1x1xf32>
    %160 = vector.broadcast %159 : vector<1x1xf32> to vector<1x128xf32>
    %161 = vector.broadcast %cst_67 : f32 to vector<1x128xf32>
    %162 = arith.select %158, %160, %161 : vector<1x128xi1>, vector<1x128xf32>
    %163 = vector.shape_cast %136 : vector<1x1xf32> to vector<1x1xf32>
    %164 = vector.broadcast %163 : vector<1x1xf32> to vector<1x128xf32>
    %165 = arith.select %156, %164, %162 : vector<1x128xi1>, vector<1x128xf32>
    %c0_68 = arith.constant 0 : index
    %c0_69 = arith.constant 0 : index
    %166 = vector.load %arg10[%c0_68, %c0_69] : memref<1x128xf32, #tpu.memory_space<vmem>>, vector<1x128xf32>
    tpu.vector_store %arg10[%c0_68, %c0_69], %165 {strides = array<i32>} : memref<1x128xf32, #tpu.memory_space<vmem>>, vector<1x128xf32>,
    return
  }
}

</mosaic_0001>

<llo_original>
// kernel: tpu_custom_call.1
$region0: #{tpu_custom_call.1}
  #allocation0 [shape = 'u32[]', space=smem, size = 0x4, offset = 0x4, fixed_abs, tag = 'smem constant byte address 0x4 - core index']
  #allocation1 [shape = 'u32[144,128]{1,0:T(1,128)}', space=vmem, size = 0x12000, scoped, tag = 'internal scratch']
  %s0 = inlined_call_operand.hbm [shape: bf16[8,128], index: 0, kind: input, shape index: {}]
  %s1 = inlined_call_operand.hbm [shape: bf16[8,128], index: 1, kind: input, shape index: {}]
  %s2 = inlined_call_operand.hbm [shape: bf16[128,256], index: 2, kind: input, shape index: {}]
  %s3 = inlined_call_operand.vmem [shape: f32[1,256], index: 3, kind: input, shape index: {}]
  %s4 = inlined_call_operand.hbm [shape: bf16[256,128], index: 4, kind: input, shape index: {}]
  %s5 = inlined_call_operand.vmem [shape: f32[1,128], index: 5, kind: input, shape index: {}]
  %s6 = inlined_call_operand.hbm [shape: bf16[128,256], index: 6, kind: input, shape index: {}]
  %s7 = inlined_call_operand.vmem [shape: f32[1,256], index: 7, kind: input, shape index: {}]
  %s8 = inlined_call_operand.hbm [shape: bf16[256,128], index: 8, kind: input, shape index: {}]
  %s9 = inlined_call_operand.vmem [shape: f32[1,128], index: 9, kind: input, shape index: {}]
  %s10 = inlined_call_operand.hbm [shape: f32[1,128], index: 10, kind: output, shape index: {}]
  %s11 = sld [smem:[#allocation0]]
  $region74: #{tpu_custom_call.1} parent=0
    _
  %s13 = ssub.s32 1, %s11
  %s14 = scalar_select 0, %s13, %s11
  $region1: #{tpu_custom_call.1} parent=0
    #allocation2 [shape = 'u8[2048]{0}', space=vmem, size = 0x800, scoped, tag = 'input window, operand 0, single buffered']
    #allocation3 [shape = 's32[1]{0}', space=sflag, size = 0x4, scoped, tag = 'scoped memory for tpu_custom_call.1']
    #allocation4 [shape = 's32[1]{0}', space=sflag, size = 0x4, scoped, tag = 'scoped memory for tpu_custom_call.1']
    #allocation5 [shape = 'u8[2048]{0}', space=vmem, size = 0x800, scoped, tag = 'input window, operand 1, single buffered']
    #allocation6 [shape = 's32[1]{0}', space=sflag, size = 0x4, scoped, tag = 'scoped memory for tpu_custom_call.1']
    #allocation7 [shape = 'u8[65536]{0}', space=vmem, size = 0x10000, scoped, tag = 'input window, operand 2, single buffered']
    #allocation8 [shape = 'u8[65536]{0}', space=vmem, size = 0x10000, scoped, tag = 'input window, operand 4, single buffered']
    #allocation9 [shape = 's32[1]{0}', space=sflag, size = 0x4, scoped, tag = 'scoped memory for tpu_custom_call.1']
    #allocation10 [shape = 'u8[65536]{0}', space=vmem, size = 0x10000, scoped, tag = 'input window, operand 6, single buffered']
    #allocation11 [shape = 'u8[65536]{0}', space=vmem, size = 0x10000, scoped, tag = 'input window, operand 8, single buffered']
    #allocation12 [shape = 's32[1]{0}', space=sflag, size = 0x4, scoped, tag = 'scoped memory for tpu_custom_call.1']
    #allocation13 [shape = 'u8[512]{0}', space=vmem, size = 0x400, scoped, tag = 'output window, operand 0, single buffered']
    %15 = vsyncpa [#allocation3], 0
    %16 = vsyncpa [#allocation6], 0
    %17 = vsyncpa [#allocation9], 0
    %18 = vsyncpa [#allocation12], 0
    %19 = vsyncpa [#allocation4], 0
    // Predicated region
    $region2: #{tpu_custom_call.1} parent=1 // pred_check
      _
    $region3: #{tpu_custom_call.1} parent=1 // pred_check_branch
      %21 = sbr.rel (0) target = $region5
    $region4: #{tpu_custom_call.1} parent=1 // pred_region
      %s23 = ssub.s32 64, 64
      %24 = vsyncadd [#allocation3], %s23
      %s26 = sshll.u32 [#allocation2], 4
      %s27 = int_to_ptr.vmem [resolvable:$true] %s26
      %29 = dma.hbm_to_vmem [thread:$0]  %s0, 64, %s27, [#allocation3]
    $region5: #{tpu_custom_call.1} parent=1 // pred_fallthru
      _
    // Predicated region
    $region6: #{tpu_custom_call.1} parent=1 // pred_check
      _
    $region7: #{tpu_custom_call.1} parent=1 // pred_check_branch
      %31 = sbr.rel (0) target = $region9
    $region8: #{tpu_custom_call.1} parent=1 // pred_region
      %s33 = ssub.s32 64, 64
      %34 = vsyncadd [#allocation6], %s33
      %s36 = sshll.u32 [#allocation5], 4
      %s37 = int_to_ptr.vmem [resolvable:$true] %s36
      %39 = dma.hbm_to_vmem [thread:$0]  %s1, 64, %s37, [#allocation6]
    $region9: #{tpu_custom_call.1} parent=1 // pred_fallthru
      _
    // Predicated region
    $region10: #{tpu_custom_call.1} parent=1 // pred_check
      _
    $region11: #{tpu_custom_call.1} parent=1 // pred_check_branch
      %41 = sbr.rel (0) target = $region13
    $region12: #{tpu_custom_call.1} parent=1 // pred_region
      %s43 = ssub.s32 2048, 2048
      %44 = vsyncadd [#allocation6], %s43
      %s45 = sshll.u32 [#allocation7], 4
      %s46 = int_to_ptr.vmem [resolvable:$true] %s45
      %51 = dma.hbm_to_vmem [thread:$0]  %s2, 2048, %s46, [#allocation6], 128, 128, 8
    $region13: #{tpu_custom_call.1} parent=1 // pred_fallthru
      _
    // Predicated region
    $region14: #{tpu_custom_call.1} parent=1 // pred_check
      _
    $region15: #{tpu_custom_call.1} parent=1 // pred_check_branch
      %53 = sbr.rel (0) target = $region17
    $region16: #{tpu_custom_call.1} parent=1 // pred_region
      _
    $region17: #{tpu_custom_call.1} parent=1 // pred_fallthru
      _
    // Predicated region
    $region18: #{tpu_custom_call.1} parent=1 // pred_check
      _
    $region19: #{tpu_custom_call.1} parent=1 // pred_check_branch
      %55 = sbr.rel (0) target = $region21
    $region20: #{tpu_custom_call.1} parent=1 // pred_region
      %s57 = ssub.s32 2048, 2048
      %58 = vsyncadd [#allocation9], %s57
      %s59 = sshll.u32 [#allocation8], 4
      %s60 = int_to_ptr.vmem [resolvable:$true] %s59
      %65 = dma.hbm_to_vmem [thread:$0]  %s4, 2048, %s60, [#allocation9], 64, 64, 4
    $region21: #{tpu_custom_call.1} parent=1 // pred_fallthru
      _
    // Predicated region
    $region22: #{tpu_custom_call.1} parent=1 // pred_check
      _
    $region23: #{tpu_custom_call.1} parent=1 // pred_check_branch
      %67 = sbr.rel (0) target = $region25
    $region24: #{tpu_custom_call.1} parent=1 // pred_region
      _
    $region25: #{tpu_custom_call.1} parent=1 // pred_fallthru
      _
    // Predicated region
    $region26: #{tpu_custom_call.1} parent=1 // pred_check
      _
    $region27: #{tpu_custom_call.1} parent=1 // pred_check_branch
      %69 = sbr.rel (0) target = $region29
    $region28: #{tpu_custom_call.1} parent=1 // pred_region
      %s71 = ssub.s32 2048, 2048
      %72 = vsyncadd [#allocation9], %s71
      %s73 = sshll.u32 [#allocation10], 4
      %s74 = int_to_ptr.vmem [resolvable:$true] %s73
      %79 = dma.hbm_to_vmem [thread:$0]  %s6, 2048, %s74, [#allocation9], 128, 128, 8
    $region29: #{tpu_custom_call.1} parent=1 // pred_fallthru
      _
    // Predicated region
    $region30: #{tpu_custom_call.1} parent=1 // pred_check
      _
    $region31: #{tpu_custom_call.1} parent=1 // pred_check_branch
      %81 = sbr.rel (0) target = $region33
    $region32: #{tpu_custom_call.1} parent=1 // pred_region
      _
    $region33: #{tpu_custom_call.1} parent=1 // pred_fallthru
      _
    // Predicated region
    $region34: #{tpu_custom_call.1} parent=1 // pred_check
      _
    $region35: #{tpu_custom_call.1} parent=1 // pred_check_branch
      %83 = sbr.rel (0) target = $region37
    $region36: #{tpu_custom_call.1} parent=1 // pred_region
      %s85 = ssub.s32 2048, 2048
      %86 = vsyncadd [#allocation12], %s85
      %s87 = sshll.u32 [#allocation11], 4
      %s88 = int_to_ptr.vmem [resolvable:$true] %s87
      %93 = dma.hbm_to_vmem [thread:$0]  %s8, 2048, %s88, [#allocation12], 64, 64, 4
    $region37: #{tpu_custom_call.1} parent=1 // pred_fallthru
      _
    // Predicated region
    $region38: #{tpu_custom_call.1} parent=1 // pred_check
      _
    $region39: #{tpu_custom_call.1} parent=1 // pred_check_branch
      %95 = sbr.rel (0) target = $region41
    $region40: #{tpu_custom_call.1} parent=1 // pred_region
      _
    $region41: #{tpu_custom_call.1} parent=1 // pred_fallthru
      _
    // Predicated region
    $region42: #{tpu_custom_call.1} parent=1 // pred_check
      _
    $region43: #{tpu_custom_call.1} parent=1 // pred_check_branch
      %97 = sbr.rel (0) target = $region45
    $region44: #{tpu_custom_call.1} parent=1 // pred_region
      %98 = dma.done [#allocation3], 64
    $region45: #{tpu_custom_call.1} parent=1 // pred_fallthru
      _
    // Predicated region
    $region46: #{tpu_custom_call.1} parent=1 // pred_check
      _
    $region47: #{tpu_custom_call.1} parent=1 // pred_check_branch
      %100 = sbr.rel (0) target = $region49
    $region48: #{tpu_custom_call.1} parent=1 // pred_region
      %101 = dma.done [#allocation6], 64
    $region49: #{tpu_custom_call.1} parent=1 // pred_fallthru
      _
    // Predicated region
    $region50: #{tpu_custom_call.1} parent=1 // pred_check
      _
    $region51: #{tpu_custom_call.1} parent=1 // pred_check_branch
      %103 = sbr.rel (0) target = $region53
    $region52: #{tpu_custom_call.1} parent=1 // pred_region
      %104 = dma.done [#allocation6], 2048
    $region53: #{tpu_custom_call.1} parent=1 // pred_fallthru
      _
    // Predicated region
    $region54: #{tpu_custom_call.1} parent=1 // pred_check
      _
    $region55: #{tpu_custom_call.1} parent=1 // pred_check_branch
      %106 = sbr.rel (0) target = $region57
    $region56: #{tpu_custom_call.1} parent=1 // pred_region
      %107 = dma.done [#allocation9], 2048
    $region57: #{tpu_custom_call.1} parent=1 // pred_fallthru
      _
    // Predicated region
    $region58: #{tpu_custom_call.1} parent=1 // pred_check
      _
    $region59: #{tpu_custom_call.1} parent=1 // pred_check_branch
      %109 = sbr.rel (0) target = $region61
    $region60: #{tpu_custom_call.1} parent=1 // pred_region
      %110 = dma.done [#allocation9], 2048
    $region61: #{tpu_custom_call.1} parent=1 // pred_fallthru
      _
    // Predicated region
    $region62: #{tpu_custom_call.1} parent=1 // pred_check
      _
    $region63: #{tpu_custom_call.1} parent=1 // pred_check_branch
      %112 = sbr.rel (0) target = $region65
    $region64: #{tpu_custom_call.1} parent=1 // pred_region
      %113 = dma.done [#allocation12], 2048
    $region65: #{tpu_custom_call.1} parent=1 // pred_fallthru
      _
    %v115 = vld [vmem:[#allocation2] sm:$0xf]
    %v116 = vld [vmem:[#allocation7] sm:$0xff]
    %v117 = vld [vmem:[#allocation7 + $0x8] sm:$0xff]
    %v118 = vld [vmem:[#allocation7 + $0x10] sm:$0xff]
    %v119 = vld [vmem:[#allocation7 + $0x18] sm:$0xff]
    %v120 = vld [vmem:[#allocation7 + $0x20] sm:$0xff]
    %v121 = vld [vmem:[#allocation7 + $0x28] sm:$0xff]
    %v122 = vld [vmem:[#allocation7 + $0x30] sm:$0xff]
    %v123 = vld [vmem:[#allocation7 + $0x38] sm:$0xff]
    %v124 = vld [vmem:[#allocation7 + $0x40] sm:$0xff]
    %v125 = vld [vmem:[#allocation7 + $0x48] sm:$0xff]
    %v126 = vld [vmem:[#allocation7 + $0x50] sm:$0xff]
    %v127 = vld [vmem:[#allocation7 + $0x58] sm:$0xff]
    %v128 = vld [vmem:[#allocation7 + $0x60] sm:$0xff]
    %v129 = vld [vmem:[#allocation7 + $0x68] sm:$0xff]
    %v130 = vld [vmem:[#allocation7 + $0x70] sm:$0xff]
    %v131 = vld [vmem:[#allocation7 + $0x78] sm:$0xff]
    %v132 = vld [vmem:[%s3] sm:$0x3]
    %v133 = vld [vmem:[#allocation8] sm:$0xf]
    %v134 = vld [vmem:[#allocation8 + $0x4] sm:$0xf]
    %v135 = vld [vmem:[#allocation8 + $0x8] sm:$0xf]
    %v136 = vld [vmem:[#allocation8 + $0xc] sm:$0xf]
    %v137 = vld [vmem:[#allocation8 + $0x10] sm:$0xf]
    %v138 = vld [vmem:[#allocation8 + $0x14] sm:$0xf]
    %v139 = vld [vmem:[#allocation8 + $0x18] sm:$0xf]
    %v140 = vld [vmem:[#allocation8 + $0x1c] sm:$0xf]
    %v141 = vld [vmem:[#allocation8 + $0x20] sm:$0xf]
    %v142 = vld [vmem:[#allocation8 + $0x24] sm:$0xf]
    %v143 = vld [vmem:[#allocation8 + $0x28] sm:$0xf]
    %v144 = vld [vmem:[#allocation8 + $0x2c] sm:$0xf]
    %v145 = vld [vmem:[#allocation8 + $0x30] sm:$0xf]
    %v146 = vld [vmem:[#allocation8 + $0x34] sm:$0xf]
    %v147 = vld [vmem:[#allocation8 + $0x38] sm:$0xf]
    %v148 = vld [vmem:[#allocation8 + $0x3c] sm:$0xf]
    %v149 = vld [vmem:[#allocation8 + $0x40] sm:$0xf]
    %v150 = vld [vmem:[#allocation8 + $0x44] sm:$0xf]
    %v151 = vld [vmem:[#allocation8 + $0x48] sm:$0xf]
    %v152 = vld [vmem:[#allocation8 + $0x4c] sm:$0xf]
    %v153 = vld [vmem:[#allocation8 + $0x50] sm:$0xf]
    %v154 = vld [vmem:[#allocation8 + $0x54] sm:$0xf]
    %v155 = vld [vmem:[#allocation8 + $0x58] sm:$0xf]
    %v156 = vld [vmem:[#allocation8 + $0x5c] sm:$0xf]
    %v157 = vld [vmem:[#allocation8 + $0x60] sm:$0xf]
    %v158 = vld [vmem:[#allocation8 + $0x64] sm:$0xf]
    %v159 = vld [vmem:[#allocation8 + $0x68] sm:$0xf]
    %v160 = vld [vmem:[#allocation8 + $0x6c] sm:$0xf]
    %v161 = vld [vmem:[#allocation8 + $0x70] sm:$0xf]
    %v162 = vld [vmem:[#allocation8 + $0x74] sm:$0xf]
    %v163 = vld [vmem:[#allocation8 + $0x78] sm:$0xf]
    %v164 = vld [vmem:[#allocation8 + $0x7c] sm:$0xf]
    %v165 = vld [vmem:[%s5] sm:$0x1]
    %v167 = vlaneseq
    %v168 = vshrl.u32 %v167, 7
    %v169 = vsub.s32 0, %v168
    %v170 = vrot.slane %v132, %v169
    %v171 = vlaneseq
    %v172 = vshrl.u32 %v171, 7
    %v173 = vsub.s32 1, %v172
    %v174 = vrot.slane %v132, %v173
    %v193 = vunpack.c.l.b16 %v116
    %v194 = vunpack.c.h.b16 %v116
    %v195 = vunpack.c.l.b16 %v117
    %v196 = vunpack.c.h.b16 %v117
    %v197 = vunpack.c.l.b16 %v118
    %v198 = vunpack.c.h.b16 %v118
    %v199 = vunpack.c.l.b16 %v119
    %v200 = vunpack.c.h.b16 %v119
    %v201 = vunpack.c.l.b16 %v120
    %v202 = vunpack.c.h.b16 %v120
    %v203 = vunpack.c.l.b16 %v121
    %v204 = vunpack.c.h.b16 %v121
    %v205 = vunpack.c.l.b16 %v122
    %v206 = vunpack.c.h.b16 %v122
    %v207 = vunpack.c.l.b16 %v123
    %v208 = vunpack.c.h.b16 %v123
    %v209 = vunpack.c.l.b16 %v124
    %v210 = vunpack.c.h.b16 %v124
    %v211 = vunpack.c.l.b16 %v125
    %v212 = vunpack.c.h.b16 %v125
    %v213 = vunpack.c.l.b16 %v126
    %v214 = vunpack.c.h.b16 %v126
    %v215 = vunpack.c.l.b16 %v127
    %v216 = vunpack.c.h.b16 %v127
    %v217 = vunpack.c.l.b16 %v128
    %v218 = vunpack.c.h.b16 %v128
    %v219 = vunpack.c.l.b16 %v129
    %v220 = vunpack.c.h.b16 %v129
    %v221 = vunpack.c.l.b16 %v130
    %v222 = vunpack.c.h.b16 %v130
    %v223 = vunpack.c.l.b16 %v131
    %v224 = vunpack.c.h.b16 %v131
    %v225 = vpack.c.b16 %v195, %v193
    %v226 = vpack.c.b16 %v196, %v194
    %v227 = vpack.c.b16 %v199, %v197
    %v228 = vpack.c.b16 %v200, %v198
    %v229 = vpack.c.b16 %v203, %v201
    %v230 = vpack.c.b16 %v204, %v202
    %v231 = vpack.c.b16 %v207, %v205
    %v232 = vpack.c.b16 %v208, %v206
    %v233 = vpack.c.b16 %v211, %v209
    %v234 = vpack.c.b16 %v212, %v210
    %v235 = vpack.c.b16 %v215, %v213
    %v236 = vpack.c.b16 %v216, %v214
    %v237 = vpack.c.b16 %v219, %v217
    %v238 = vpack.c.b16 %v220, %v218
    %v239 = vpack.c.b16 %v223, %v221
    %v240 = vpack.c.b16 %v224, %v222
    %257 = vmatprep.subr.bf16.mxu0 %v226
    %258 = vmatpush1.bf16.msra.mxu0 %v225
    %259 = vmatprep.subr.bf16.mxu0 %v228
    %260 = vmatpush1.bf16.msra.mxu0 %v227
    %261 = vmatprep.subr.bf16.mxu0 %v230
    %262 = vmatpush1.bf16.msra.mxu0 %v229
    %263 = vmatprep.subr.bf16.mxu0 %v232
    %264 = vmatpush1.bf16.msra.mxu0 %v231
    %265 = vmatprep.subr.bf16.mxu0 %v234
    %266 = vmatpush1.bf16.msra.mxu0 %v233
    %267 = vmatprep.subr.bf16.mxu0 %v236
    %268 = vmatpush1.bf16.msra.mxu0 %v235
    %269 = vmatprep.subr.bf16.mxu0 %v238
    %270 = vmatpush1.bf16.msra.mxu0 %v237
    %271 = vmatprep.subr.bf16.mxu0 %v240
    %272 = vmatpush1.bf16.msra.mxu0 %v239
    %273 = vmatprep.subr.bf16.mxu0 0
    %274 = vmatpush1.bf16.msra.mxu0 0
    %275 = vmatprep.subr.bf16.mxu0 0
    %276 = vmatpush1.bf16.msra.mxu0 0
    %277 = vmatprep.subr.bf16.mxu0 0
    %278 = vmatpush1.bf16.msra.mxu0 0
    %279 = vmatprep.subr.bf16.mxu0 0
    %280 = vmatpush1.bf16.msra.mxu0 0
    %281 = vmatprep.subr.bf16.mxu0 0
    %282 = vmatpush1.bf16.msra.mxu0 0
    %283 = vmatprep.subr.bf16.mxu0 0
    %284 = vmatpush1.bf16.msra.mxu0 0
    %285 = vmatprep.subr.bf16.mxu0 0
    %286 = vmatpush1.bf16.msra.mxu0 0
    %287 = vmatprep.subr.bf16.mxu0 0
    %288 = vmatpush1.bf16.msra.mxu0 0
    %289 = vmatprep.mubr.bf16.mxu0 0
    %290 = vmatmul.mubr.bf16.gmra.mrb[0].mxu0 %v115
    %v291 = vpop.f32.mrb[0].mxu0
    %v292 = vadd.f32 %v170, %v291
    %v293 = vpop.f32.mrb[0].mxu0
    %v294 = vadd.f32 %v174, %v293
    %v295 = vpop.f32.mrb[0].mxu0
    %v296 = vpop.f32.mrb[0].mxu0
    %297 = vdwg.mxu0
    %v298 = vrot.slane %v292, 4
    %v299 = vadd.f32 %v292, %v298
    %v300 = vrot.slane %v299, 2
    %v301 = vadd.f32 %v299, %v300
    %v302 = vrot.slane %v301, 1
    %v303 = vadd.f32 %v301, %v302
    %v304 = vrot.slane %v294, 4
    %v305 = vadd.f32 %v294, %v304
    %v306 = vrot.slane %v305, 2
    %v307 = vadd.f32 %v305, %v306
    %v308 = vrot.slane %v307, 1
    %v309 = vadd.f32 %v307, %v308
    %v310 = vrcp.pop 8.0
    %v311 = vmul.f32 %v303, %v310
    %v312 = vmul.f32 %v309, %v310
    %v313 = vsub.f32 %v292, %v311
    %v314 = vsub.f32 %v294, %v312
    %v315 = vmul.f32 %v313, %v313
    %v316 = vmul.f32 %v314, %v314
    %v317 = vrot.slane %v315, 4
    %v318 = vadd.f32 %v315, %v317
    %v319 = vrot.slane %v318, 2
    %v320 = vadd.f32 %v318, %v319
    %v321 = vrot.slane %v320, 1
    %v322 = vadd.f32 %v320, %v321
    %v323 = vrot.slane %v316, 4
    %v324 = vadd.f32 %v316, %v323
    %v325 = vrot.slane %v324, 2
    %v326 = vadd.f32 %v324, %v325
    %v327 = vrot.slane %v326, 1
    %v328 = vadd.f32 %v326, %v327
    %v329 = vmul.f32 %v322, %v310
    %v330 = vmul.f32 %v328, %v310
    %v331 = vadd.f32 %v329, 1e-05
    %v332 = vadd.f32 %v330, 1e-05
    %v333 = vrsqrt.pop %v331
    %v334 = vrsqrt.pop %v332
    %v335 = vmul.f32 %v313, %v333
    %v336 = vmul.f32 %v314, %v334
    %v337 = vmax.f32 %v335, 0.0
    %v338 = vmax.f32 %v336, 0.0
    %v339 = vpack.c.bf16 %v337, %v337
    %v340 = vpack.c.bf16 %v338, %v338
    %v342 = vlaneseq
    %v343 = vshrl.u32 %v342, 7
    %v344 = vsub.s32 0, %v343
    %v345 = vrot.slane %v165, %v344
    %v379 = vunpack.c.l.b16 %v133
    %v380 = vunpack.c.l.b16 %v134
    %v381 = vunpack.c.l.b16 %v135
    %v382 = vunpack.c.l.b16 %v136
    %v383 = vunpack.c.l.b16 %v137
    %v384 = vunpack.c.l.b16 %v138
    %v385 = vunpack.c.l.b16 %v139
    %v386 = vunpack.c.l.b16 %v140
    %v387 = vunpack.c.l.b16 %v141
    %v388 = vunpack.c.l.b16 %v142
    %v389 = vunpack.c.l.b16 %v143
    %v390 = vunpack.c.l.b16 %v144
    %v391 = vunpack.c.l.b16 %v145
    %v392 = vunpack.c.l.b16 %v146
    %v393 = vunpack.c.l.b16 %v147
    %v394 = vunpack.c.l.b16 %v148
    %v395 = vunpack.c.l.b16 %v149
    %v396 = vunpack.c.l.b16 %v150
    %v397 = vunpack.c.l.b16 %v151
    %v398 = vunpack.c.l.b16 %v152
    %v399 = vunpack.c.l.b16 %v153
    %v400 = vunpack.c.l.b16 %v154
    %v401 = vunpack.c.l.b16 %v155
    %v402 = vunpack.c.l.b16 %v156
    %v403 = vunpack.c.l.b16 %v157
    %v404 = vunpack.c.l.b16 %v158
    %v405 = vunpack.c.l.b16 %v159
    %v406 = vunpack.c.l.b16 %v160
    %v407 = vunpack.c.l.b16 %v161
    %v408 = vunpack.c.l.b16 %v162
    %v409 = vunpack.c.l.b16 %v163
    %v410 = vunpack.c.l.b16 %v164
    %v411 = vpack.c.b16 %v380, %v379
    %v412 = vpack.c.b16 %v382, %v381
    %v413 = vpack.c.b16 %v384, %v383
    %v414 = vpack.c.b16 %v386, %v385
    %v415 = vpack.c.b16 %v388, %v387
    %v416 = vpack.c.b16 %v390, %v389
    %v417 = vpack.c.b16 %v392, %v391
    %v418 = vpack.c.b16 %v394, %v393
    %v419 = vpack.c.b16 %v396, %v395
    %v420 = vpack.c.b16 %v398, %v397
    %v421 = vpack.c.b16 %v400, %v399
    %v422 = vpack.c.b16 %v402, %v401
    %v423 = vpack.c.b16 %v404, %v403
    %v424 = vpack.c.b16 %v406, %v405
    %v425 = vpack.c.b16 %v408, %v407
    %v426 = vpack.c.b16 %v410, %v409
    %443 = vmatprep.subr.bf16.mxu0 0
    %444 = vmatpush1.bf16.msra.mxu0 %v411
    %445 = vmatprep.subr.bf16.mxu0 0
    %446 = vmatpush1.bf16.msra.mxu0 %v412
    %447 = vmatprep.subr.bf16.mxu0 0
    %448 = vmatpush1.bf16.msra.mxu0 %v413
    %449 = vmatprep.subr.bf16.mxu0 0
    %450 = vmatpush1.bf16.msra.mxu0 %v414
    %451 = vmatprep.subr.bf16.mxu0 0
    %452 = vmatpush1.bf16.msra.mxu0 %v415
    %453 = vmatprep.subr.bf16.mxu0 0
    %454 = vmatpush1.bf16.msra.mxu0 %v416
    %455 = vmatprep.subr.bf16.mxu0 0
    %456 = vmatpush1.bf16.msra.mxu0 %v417
    %457 = vmatprep.subr.bf16.mxu0 0
    %458 = vmatpush1.bf16.msra.mxu0 %v418
    %459 = vmatprep.subr.bf16.mxu0 0
    %460 = vmatpush1.bf16.msra.mxu0 %v419
    %461 = vmatprep.subr.bf16.mxu0 0
    %462 = vmatpush1.bf16.msra.mxu0 %v420
    %463 = vmatprep.subr.bf16.mxu0 0
    %464 = vmatpush1.bf16.msra.mxu0 %v421
    %465 = vmatprep.subr.bf16.mxu0 0
    %466 = vmatpush1.bf16.msra.mxu0 %v422
    %467 = vmatprep.subr.bf16.mxu0 0
    %468 = vmatpush1.bf16.msra.mxu0 %v423
    %469 = vmatprep.subr.bf16.mxu0 0
    %470 = vmatpush1.bf16.msra.mxu0 %v424
    %471 = vmatprep.subr.bf16.mxu0 0
    %472 = vmatpush1.bf16.msra.mxu0 %v425
    %473 = vmatprep.subr.bf16.mxu0 0
    %474 = vmatpush1.bf16.msra.mxu0 %v426
    %475 = vmatprep.mubr.bf16.mxu0 %v340
    %476 = vmatmul.mubr.bf16.gmra.mrb[0].mxu0 %v339
    %v477 = vpop.f32.mrb[0].mxu0
    %v478 = vadd.f32 %v345, %v477
    %v479 = vpop.f32.mrb[0].mxu0
    %v480 = vpop.f32.mrb[0].mxu0
    %v481 = vpop.f32.mrb[0].mxu0
    %482 = vdwg.mxu0
    %v483 = vrot.slane %v478, 4
    %v484 = vadd.f32 %v478, %v483
    %v485 = vrot.slane %v484, 2
    %v486 = vadd.f32 %v484, %v485
    %v487 = vrot.slane %v486, 1
    %v488 = vadd.f32 %v486, %v487
    %v489 = vmul.f32 %v488, %v310
    %v490 = vsub.f32 %v478, %v489
    %v491 = vmul.f32 %v490, %v490
    %v492 = vrot.slane %v491, 4
    %v493 = vadd.f32 %v491, %v492
    %v494 = vrot.slane %v493, 2
    %v495 = vadd.f32 %v493, %v494
    %v496 = vrot.slane %v495, 1
    %v497 = vadd.f32 %v495, %v496
    %v498 = vmul.f32 %v497, %v310
    %v499 = vadd.f32 %v498, 1e-05
    %v500 = vrsqrt.pop %v499
    %v501 = vmul.f32 %v490, %v500
    %v502 = vmul.f32 %v501, %v501
    %503 = vadd.xlane.f32.xlu0 %v502
    %v504 = vpop.xlane.xlu0 %503
    %v505 = vmax.f32 %v504, 1e-24
    %v506 = vrsqrt.pop %v505
    %v507 = vmul.f32 %v501, %v506
    %v508 = vld [vmem:[#allocation5] sm:$0xf]
    %v509 = vld [vmem:[#allocation10] sm:$0xff]
    %v510 = vld [vmem:[#allocation10 + $0x8] sm:$0xff]
    %v511 = vld [vmem:[#allocation10 + $0x10] sm:$0xff]
    %v512 = vld [vmem:[#allocation10 + $0x18] sm:$0xff]
    %v513 = vld [vmem:[#allocation10 + $0x20] sm:$0xff]
    %v514 = vld [vmem:[#allocation10 + $0x28] sm:$0xff]
    %v515 = vld [vmem:[#allocation10 + $0x30] sm:$0xff]
    %v516 = vld [vmem:[#allocation10 + $0x38] sm:$0xff]
    %v517 = vld [vmem:[#allocation10 + $0x40] sm:$0xff]
    %v518 = vld [vmem:[#allocation10 + $0x48] sm:$0xff]
    %v519 = vld [vmem:[#allocation10 + $0x50] sm:$0xff]
    %v520 = vld [vmem:[#allocation10 + $0x58] sm:$0xff]
    %v521 = vld [vmem:[#allocation10 + $0x60] sm:$0xff]
    %v522 = vld [vmem:[#allocation10 + $0x68] sm:$0xff]
    %v523 = vld [vmem:[#allocation10 + $0x70] sm:$0xff]
    %v524 = vld [vmem:[#allocation10 + $0x78] sm:$0xff]
    %v525 = vld [vmem:[%s7] sm:$0x3]
    %v526 = vld [vmem:[#allocation11] sm:$0xf]
    %v527 = vld [vmem:[#allocation11 + $0x4] sm:$0xf]
    %v528 = vld [vmem:[#allocation11 + $0x8] sm:$0xf]
    %v529 = vld [vmem:[#allocation11 + $0xc] sm:$0xf]
    %v530 = vld [vmem:[#allocation11 + $0x10] sm:$0xf]
    %v531 = vld [vmem:[#allocation11 + $0x14] sm:$0xf]
    %v532 = vld [vmem:[#allocation11 + $0x18] sm:$0xf]
    %v533 = vld [vmem:[#allocation11 + $0x1c] sm:$0xf]
    %v534 = vld [vmem:[#allocation11 + $0x20] sm:$0xf]
    %v535 = vld [vmem:[#allocation11 + $0x24] sm:$0xf]
    %v536 = vld [vmem:[#allocation11 + $0x28] sm:$0xf]
    %v537 = vld [vmem:[#allocation11 + $0x2c] sm:$0xf]
    %v538 = vld [vmem:[#allocation11 + $0x30] sm:$0xf]
    %v539 = vld [vmem:[#allocation11 + $0x34] sm:$0xf]
    %v540 = vld [vmem:[#allocation11 + $0x38] sm:$0xf]
    %v541 = vld [vmem:[#allocation11 + $0x3c] sm:$0xf]
    %v542 = vld [vmem:[#allocation11 + $0x40] sm:$0xf]
    %v543 = vld [vmem:[#allocation11 + $0x44] sm:$0xf]
    %v544 = vld [vmem:[#allocation11 + $0x48] sm:$0xf]
    %v545 = vld [vmem:[#allocation11 + $0x4c] sm:$0xf]
    %v546 = vld [vmem:[#allocation11 + $0x50] sm:$0xf]
    %v547 = vld [vmem:[#allocation11 + $0x54] sm:$0xf]
    %v548 = vld [vmem:[#allocation11 + $0x58] sm:$0xf]
    %v549 = vld [vmem:[#allocation11 + $0x5c] sm:$0xf]
    %v550 = vld [vmem:[#allocation11 + $0x60] sm:$0xf]
    %v551 = vld [vmem:[#allocation11 + $0x64] sm:$0xf]
    %v552 = vld [vmem:[#allocation11 + $0x68] sm:$0xf]
    %v553 = vld [vmem:[#allocation11 + $0x6c] sm:$0xf]
    %v554 = vld [vmem:[#allocation11 + $0x70] sm:$0xf]
    %v555 = vld [vmem:[#allocation11 + $0x74] sm:$0xf]
    %v556 = vld [vmem:[#allocation11 + $0x78] sm:$0xf]
    %v557 = vld [vmem:[#allocation11 + $0x7c] sm:$0xf]
    %v558 = vld [vmem:[%s9] sm:$0x1]
    %v560 = vlaneseq
    %v561 = vshrl.u32 %v560, 7
    %v562 = vsub.s32 0, %v561
    %v563 = vrot.slane %v525, %v562
    %v564 = vlaneseq
    %v565 = vshrl.u32 %v564, 7
    %v566 = vsub.s32 1, %v565
    %v567 = vrot.slane %v525, %v566
    %v586 = vunpack.c.l.b16 %v509
    %v587 = vunpack.c.h.b16 %v509
    %v588 = vunpack.c.l.b16 %v510
    %v589 = vunpack.c.h.b16 %v510
    %v590 = vunpack.c.l.b16 %v511
    %v591 = vunpack.c.h.b16 %v511
    %v592 = vunpack.c.l.b16 %v512
    %v593 = vunpack.c.h.b16 %v512
    %v594 = vunpack.c.l.b16 %v513
    %v595 = vunpack.c.h.b16 %v513
    %v596 = vunpack.c.l.b16 %v514
    %v597 = vunpack.c.h.b16 %v514
    %v598 = vunpack.c.l.b16 %v515
    %v599 = vunpack.c.h.b16 %v515
    %v600 = vunpack.c.l.b16 %v516
    %v601 = vunpack.c.h.b16 %v516
    %v602 = vunpack.c.l.b16 %v517
    %v603 = vunpack.c.h.b16 %v517
    %v604 = vunpack.c.l.b16 %v518
    %v605 = vunpack.c.h.b16 %v518
    %v606 = vunpack.c.l.b16 %v519
    %v607 = vunpack.c.h.b16 %v519
    %v608 = vunpack.c.l.b16 %v520
    %v609 = vunpack.c.h.b16 %v520
    %v610 = vunpack.c.l.b16 %v521
    %v611 = vunpack.c.h.b16 %v521
    %v612 = vunpack.c.l.b16 %v522
    %v613 = vunpack.c.h.b16 %v522
    %v614 = vunpack.c.l.b16 %v523
    %v615 = vunpack.c.h.b16 %v523
    %v616 = vunpack.c.l.b16 %v524
    %v617 = vunpack.c.h.b16 %v524
    %v618 = vpack.c.b16 %v588, %v586
    %v619 = vpack.c.b16 %v589, %v587
    %v620 = vpack.c.b16 %v592, %v590
    %v621 = vpack.c.b16 %v593, %v591
    %v622 = vpack.c.b16 %v596, %v594
    %v623 = vpack.c.b16 %v597, %v595
    %v624 = vpack.c.b16 %v600, %v598
    %v625 = vpack.c.b16 %v601, %v599
    %v626 = vpack.c.b16 %v604, %v602
    %v627 = vpack.c.b16 %v605, %v603
    %v628 = vpack.c.b16 %v608, %v606
    %v629 = vpack.c.b16 %v609, %v607
    %v630 = vpack.c.b16 %v612, %v610
    %v631 = vpack.c.b16 %v613, %v611
    %v632 = vpack.c.b16 %v616, %v614
    %v633 = vpack.c.b16 %v617, %v615
    %650 = vmatprep.subr.bf16.mxu0 %v619
    %651 = vmatpush1.bf16.msra.mxu0 %v618
    %652 = vmatprep.subr.bf16.mxu0 %v621
    %653 = vmatpush1.bf16.msra.mxu0 %v620
    %654 = vmatprep.subr.bf16.mxu0 %v623
    %655 = vmatpush1.bf16.msra.mxu0 %v622
    %656 = vmatprep.subr.bf16.mxu0 %v625
    %657 = vmatpush1.bf16.msra.mxu0 %v624
    %658 = vmatprep.subr.bf16.mxu0 %v627
    %659 = vmatpush1.bf16.msra.mxu0 %v626
    %660 = vmatprep.subr.bf16.mxu0 %v629
    %661 = vmatpush1.bf16.msra.mxu0 %v628
    %662 = vmatprep.subr.bf16.mxu0 %v631
    %663 = vmatpush1.bf16.msra.mxu0 %v630
    %664 = vmatprep.subr.bf16.mxu0 %v633
    %665 = vmatpush1.bf16.msra.mxu0 %v632
    %666 = vmatprep.subr.bf16.mxu0 0
    %667 = vmatpush1.bf16.msra.mxu0 0
    %668 = vmatprep.subr.bf16.mxu0 0
    %669 = vmatpush1.bf16.msra.mxu0 0
    %670 = vmatprep.subr.bf16.mxu0 0
    %671 = vmatpush1.bf16.msra.mxu0 0
    %672 = vmatprep.subr.bf16.mxu0 0
    %673 = vmatpush1.bf16.msra.mxu0 0
    %674 = vmatprep.subr.bf16.mxu0 0
    %675 = vmatpush1.bf16.msra.mxu0 0
    %676 = vmatprep.subr.bf16.mxu0 0
    %677 = vmatpush1.bf16.msra.mxu0 0
    %678 = vmatprep.subr.bf16.mxu0 0
    %679 = vmatpush1.bf16.msra.mxu0 0
    %680 = vmatprep.subr.bf16.mxu0 0
    %681 = vmatpush1.bf16.msra.mxu0 0
    %682 = vmatprep.mubr.bf16.mxu0 0
    %683 = vmatmul.mubr.bf16.gmra.mrb[0].mxu0 %v508
    %v684 = vpop.f32.mrb[0].mxu0
    %v685 = vadd.f32 %v563, %v684
    %v686 = vpop.f32.mrb[0].mxu0
    %v687 = vadd.f32 %v567, %v686
    %v688 = vpop.f32.mrb[0].mxu0
    %v689 = vpop.f32.mrb[0].mxu0
    %690 = vdwg.mxu0
    %v691 = vrot.slane %v685, 4
    %v692 = vadd.f32 %v685, %v691
    %v693 = vrot.slane %v692, 2
    %v694 = vadd.f32 %v692, %v693
    %v695 = vrot.slane %v694, 1
    %v696 = vadd.f32 %v694, %v695
    %v697 = vrot.slane %v687, 4
    %v698 = vadd.f32 %v687, %v697
    %v699 = vrot.slane %v698, 2
    %v700 = vadd.f32 %v698, %v699
    %v701 = vrot.slane %v700, 1
    %v702 = vadd.f32 %v700, %v701
    %v703 = vmul.f32 %v696, %v310
    %v704 = vmul.f32 %v702, %v310
    %v705 = vsub.f32 %v685, %v703
    %v706 = vsub.f32 %v687, %v704
    %v707 = vmul.f32 %v705, %v705
    %v708 = vmul.f32 %v706, %v706
    %v709 = vrot.slane %v707, 4
    %v710 = vadd.f32 %v707, %v709
    %v711 = vrot.slane %v710, 2
    %v712 = vadd.f32 %v710, %v711
    %v713 = vrot.slane %v712, 1
    %v714 = vadd.f32 %v712, %v713
    %v715 = vrot.slane %v708, 4
    %v716 = vadd.f32 %v708, %v715
    %v717 = vrot.slane %v716, 2
    %v718 = vadd.f32 %v716, %v717
    %v719 = vrot.slane %v718, 1
    %v720 = vadd.f32 %v718, %v719
    %v721 = vmul.f32 %v714, %v310
    %v722 = vmul.f32 %v720, %v310
    %v723 = vadd.f32 %v721, 1e-05
    %v724 = vadd.f32 %v722, 1e-05
    %v725 = vrsqrt.pop %v723
    %v726 = vrsqrt.pop %v724
    %v727 = vmul.f32 %v705, %v725
    %v728 = vmul.f32 %v706, %v726
    %v729 = vmax.f32 %v727, 0.0
    %v730 = vmax.f32 %v728, 0.0
    %v731 = vpack.c.bf16 %v729, %v729
    %v732 = vpack.c.bf16 %v730, %v730
    %v734 = vlaneseq
    %v735 = vshrl.u32 %v734, 7
    %v736 = vsub.s32 0, %v735
    %v737 = vrot.slane %v558, %v736
    %v771 = vunpack.c.l.b16 %v526
    %v772 = vunpack.c.l.b16 %v527
    %v773 = vunpack.c.l.b16 %v528
    %v774 = vunpack.c.l.b16 %v529
    %v775 = vunpack.c.l.b16 %v530
    %v776 = vunpack.c.l.b16 %v531
    %v777 = vunpack.c.l.b16 %v532
    %v778 = vunpack.c.l.b16 %v533
    %v779 = vunpack.c.l.b16 %v534
    %v780 = vunpack.c.l.b16 %v535
    %v781 = vunpack.c.l.b16 %v536
    %v782 = vunpack.c.l.b16 %v537
    %v783 = vunpack.c.l.b16 %v538
    %v784 = vunpack.c.l.b16 %v539
    %v785 = vunpack.c.l.b16 %v540
    %v786 = vunpack.c.l.b16 %v541
    %v787 = vunpack.c.l.b16 %v542
    %v788 = vunpack.c.l.b16 %v543
    %v789 = vunpack.c.l.b16 %v544
    %v790 = vunpack.c.l.b16 %v545
    %v791 = vunpack.c.l.b16 %v546
    %v792 = vunpack.c.l.b16 %v547
    %v793 = vunpack.c.l.b16 %v548
    %v794 = vunpack.c.l.b16 %v549
    %v795 = vunpack.c.l.b16 %v550
    %v796 = vunpack.c.l.b16 %v551
    %v797 = vunpack.c.l.b16 %v552
    %v798 = vunpack.c.l.b16 %v553
    %v799 = vunpack.c.l.b16 %v554
    %v800 = vunpack.c.l.b16 %v555
    %v801 = vunpack.c.l.b16 %v556
    %v802 = vunpack.c.l.b16 %v557
    %v803 = vpack.c.b16 %v772, %v771
    %v804 = vpack.c.b16 %v774, %v773
    %v805 = vpack.c.b16 %v776, %v775
    %v806 = vpack.c.b16 %v778, %v777
    %v807 = vpack.c.b16 %v780, %v779
    %v808 = vpack.c.b16 %v782, %v781
    %v809 = vpack.c.b16 %v784, %v783
    %v810 = vpack.c.b16 %v786, %v785
    %v811 = vpack.c.b16 %v788, %v787
    %v812 = vpack.c.b16 %v790, %v789
    %v813 = vpack.c.b16 %v792, %v791
    %v814 = vpack.c.b16 %v794, %v793
    %v815 = vpack.c.b16 %v796, %v795
    %v816 = vpack.c.b16 %v798, %v797
    %v817 = vpack.c.b16 %v800, %v799
    %v818 = vpack.c.b16 %v802, %v801
    %835 = vmatprep.subr.bf16.mxu0 0
    %836 = vmatpush1.bf16.msra.mxu0 %v803
    %837 = vmatprep.subr.bf16.mxu0 0
    %838 = vmatpush1.bf16.msra.mxu0 %v804
    %839 = vmatprep.subr.bf16.mxu0 0
    %840 = vmatpush1.bf16.msra.mxu0 %v805
    %841 = vmatprep.subr.bf16.mxu0 0
    %842 = vmatpush1.bf16.msra.mxu0 %v806
    %843 = vmatprep.subr.bf16.mxu0 0
    %844 = vmatpush1.bf16.msra.mxu0 %v807
    %845 = vmatprep.subr.bf16.mxu0 0
    %846 = vmatpush1.bf16.msra.mxu0 %v808
    %847 = vmatprep.subr.bf16.mxu0 0
    %848 = vmatpush1.bf16.msra.mxu0 %v809
    %849 = vmatprep.subr.bf16.mxu0 0
    %850 = vmatpush1.bf16.msra.mxu0 %v810
    %851 = vmatprep.subr.bf16.mxu0 0
    %852 = vmatpush1.bf16.msra.mxu0 %v811
    %853 = vmatprep.subr.bf16.mxu0 0
    %854 = vmatpush1.bf16.msra.mxu0 %v812
    %855 = vmatprep.subr.bf16.mxu0 0
    %856 = vmatpush1.bf16.msra.mxu0 %v813
    %857 = vmatprep.subr.bf16.mxu0 0
    %858 = vmatpush1.bf16.msra.mxu0 %v814
    %859 = vmatprep.subr.bf16.mxu0 0
    %860 = vmatpush1.bf16.msra.mxu0 %v815
    %861 = vmatprep.subr.bf16.mxu0 0
    %862 = vmatpush1.bf16.msra.mxu0 %v816
    %863 = vmatprep.subr.bf16.mxu0 0
    %864 = vmatpush1.bf16.msra.mxu0 %v817
    %865 = vmatprep.subr.bf16.mxu0 0
    %866 = vmatpush1.bf16.msra.mxu0 %v818
    %867 = vmatprep.mubr.bf16.mxu0 %v732
    %868 = vmatmul.mubr.bf16.gmra.mrb[0].mxu0 %v731
    %v869 = vpop.f32.mrb[0].mxu0
    %v870 = vadd.f32 %v737, %v869
    %v871 = vpop.f32.mrb[0].mxu0
    %v872 = vpop.f32.mrb[0].mxu0
    %v873 = vpop.f32.mrb[0].mxu0
    %874 = vdwg.mxu0
    %v875 = vrot.slane %v870, 4
    %v876 = vadd.f32 %v870, %v875
    %v877 = vrot.slane %v876, 2
    %v878 = vadd.f32 %v876, %v877
    %v879 = vrot.slane %v878, 1
    %v880 = vadd.f32 %v878, %v879
    %v881 = vmul.f32 %v880, %v310
    %v882 = vsub.f32 %v870, %v881
    %v883 = vmul.f32 %v882, %v882
    %v884 = vrot.slane %v883, 4
    %v885 = vadd.f32 %v883, %v884
    %v886 = vrot.slane %v885, 2
    %v887 = vadd.f32 %v885, %v886
    %v888 = vrot.slane %v887, 1
    %v889 = vadd.f32 %v887, %v888
    %v890 = vmul.f32 %v889, %v310
    %v891 = vadd.f32 %v890, 1e-05
    %v892 = vrsqrt.pop %v891
    %v893 = vmul.f32 %v882, %v892
    %v894 = vmul.f32 %v893, %v893
    %895 = vadd.xlane.f32.xlu0 %v894
    %v896 = vpop.xlane.xlu0 %895
    %v897 = vmax.f32 %v896, 1e-24
    %v898 = vrsqrt.pop %v897
    %v899 = vmul.f32 %v893, %v898
    %v900 = vmul.f32 %v507, 14.285714
    %901 = vmatprep.subr.mxu0 0.0
    %902 = vmatpush1.xpose.msra.mxu0 %v899
    %903 = vmatprep.subr.mxu0 0.0
    %904 = vmatpush1.xpose.msra.mxu0 0.0
    %905 = vmatprep.subr.mxu0 0.0
    %906 = vmatpush1.xpose.msra.mxu0 0.0
    %907 = vmatprep.subr.mxu0 0.0
    %908 = vmatpush1.xpose.msra.mxu0 0.0
    %909 = vmatprep.subr.mxu0 0.0
    %910 = vmatpush1.xpose.msra.mxu0 0.0
    %911 = vmatprep.subr.mxu0 0.0
    %912 = vmatpush1.xpose.msra.mxu0 0.0
    %913 = vmatprep.subr.mxu0 0.0
    %914 = vmatpush1.xpose.msra.mxu0 0.0
    %915 = vmatprep.subr.mxu0 0.0
    %916 = vmatpush1.xpose.msra.mxu0 0.0
    %917 = vmatprep.subr.mxu0 0.0
    %918 = vmatpush1.xpose.msra.mxu0 0.0
    %919 = vmatprep.subr.mxu0 0.0
    %920 = vmatpush1.xpose.msra.mxu0 0.0
    %921 = vmatprep.subr.mxu0 0.0
    %922 = vmatpush1.xpose.msra.mxu0 0.0
    %923 = vmatprep.subr.mxu0 0.0
    %924 = vmatpush1.xpose.msra.mxu0 0.0
    %925 = vmatprep.subr.mxu0 0.0
    %926 = vmatpush1.xpose.msra.mxu0 0.0
    %927 = vmatprep.subr.mxu0 0.0
    %928 = vmatpush1.xpose.msra.mxu0 0.0
    %929 = vmatprep.subr.mxu0 0.0
    %930 = vmatpush1.xpose.msra.mxu0 0.0
    %931 = vmatprep.subr.mxu0 0.0
    %932 = vmatpush1.xpose.msra.mxu0 0.0
    %933 = vmatprep.subr.mxu0 0.0
    %934 = vmatpush1.xpose.msra.mxu0 0.0
    %935 = vmatprep.subr.mxu0 0.0
    %936 = vmatpush1.xpose.msra.mxu0 0.0
    %937 = vmatprep.subr.mxu0 0.0
    %938 = vmatpush1.xpose.msra.mxu0 0.0
    %939 = vmatprep.subr.mxu0 0.0
    %940 = vmatpush1.xpose.msra.mxu0 0.0
    %941 = vmatprep.subr.mxu0 0.0
    %942 = vmatpush1.xpose.msra.mxu0 0.0
    %943 = vmatprep.subr.mxu0 0.0
    %944 = vmatpush1.xpose.msra.mxu0 0.0
    %945 = vmatprep.subr.mxu0 0.0
    %946 = vmatpush1.xpose.msra.mxu0 0.0
    %947 = vmatprep.subr.mxu0 0.0
    %948 = vmatpush1.xpose.msra.mxu0 0.0
    %949 = vmatprep.subr.mxu0 0.0
    %950 = vmatpush1.xpose.msra.mxu0 0.0
    %951 = vmatprep.subr.mxu0 0.0
    %952 = vmatpush1.xpose.msra.mxu0 0.0
    %953 = vmatprep.subr.mxu0 0.0
    %954 = vmatpush1.xpose.msra.mxu0 0.0
    %955 = vmatprep.subr.mxu0 0.0
    %956 = vmatpush1.xpose.msra.mxu0 0.0
    %957 = vmatprep.subr.mxu0 0.0
    %958 = vmatpush1.xpose.msra.mxu0 0.0
    %959 = vmatprep.subr.mxu0 0.0
    %960 = vmatpush1.xpose.msra.mxu0 0.0
    %961 = vmatprep.subr.mxu0 0.0
    %962 = vmatpush1.xpose.msra.mxu0 0.0
    %963 = vmatprep.subr.mxu0 0.0
    %964 = vmatpush1.xpose.msra.mxu0 0.0
    %965 = vmatprep.mubr.f32.mxu0 0.0
    %966 = vmatmul.mubr.f32.gmra.mrb[0].mxu0 %v900
    %v967 = vpop.f32.mrb[0].mxu0
    %v968 = vadd.f32 0.0, %v967
    %v969 = vpop.f32.mrb[0].mxu0
    %970 = vdwg.mxu0
    %v971 = vlaneseq
    %v972 = vshrl.u32 %v971, 7
    %v973 = vlaneseq
    %v974 = vand.u32 %v973, 127
    %vm975 = vcmp.eq.s32.totalorder %v972, %v974
    %v976 = vsel %vm975, %v968, 0.0
    %v977 = vmul.f32 %v968, 1.442695
    %v978 = vpow.pop %v977
    %vm979 = vcmask 64512
    %v981 = vsel %vm979, %v978, 0
    %983 = vmatprep.subr.mxu0 0.0
    %984 = vmatpush1.msra.mxu0 1.0
    %985 = vmatprep.subr.mxu0 0.0
    %986 = vmatpush1.msra.mxu0 0.0
    %987 = vmatprep.subr.mxu0 0.0
    %988 = vmatpush1.msra.mxu0 0.0
    %989 = vmatprep.subr.mxu0 0.0
    %990 = vmatpush1.msra.mxu0 0.0
    %991 = vmatprep.subr.mxu0 0.0
    %992 = vmatpush1.msra.mxu0 0.0
    %993 = vmatprep.subr.mxu0 0.0
    %994 = vmatpush1.msra.mxu0 0.0
    %995 = vmatprep.subr.mxu0 0.0
    %996 = vmatpush1.msra.mxu0 0.0
    %997 = vmatprep.subr.mxu0 0.0
    %998 = vmatpush1.msra.mxu0 0.0
    %999 = vmatprep.subr.mxu0 0.0
    %1000 = vmatpush1.msra.mxu0 0.0
    %1001 = vmatprep.subr.mxu0 0.0
    %1002 = vmatpush1.msra.mxu0 0.0
    %1003 = vmatprep.subr.mxu0 0.0
    %1004 = vmatpush1.msra.mxu0 0.0
    %1005 = vmatprep.subr.mxu0 0.0
    %1006 = vmatpush1.msra.mxu0 0.0
    %1007 = vmatprep.subr.mxu0 0.0
    %1008 = vmatpush1.msra.mxu0 0.0
    %1009 = vmatprep.subr.mxu0 0.0
    %1010 = vmatpush1.msra.mxu0 0.0
    %1011 = vmatprep.subr.mxu0 0.0
    %1012 = vmatpush1.msra.mxu0 0.0
    %1013 = vmatprep.subr.mxu0 0.0
    %1014 = vmatpush1.msra.mxu0 0.0
    %1015 = vmatprep.subr.mxu0 0.0
    %1016 = vmatpush1.msra.mxu0 0.0
    %1017 = vmatprep.subr.mxu0 0.0
    %1018 = vmatpush1.msra.mxu0 0.0
    %1019 = vmatprep.subr.mxu0 0.0
    %1020 = vmatpush1.msra.mxu0 0.0
    %1021 = vmatprep.subr.mxu0 0.0
    %1022 = vmatpush1.msra.mxu0 0.0
    %1023 = vmatprep.subr.mxu0 0.0
    %1024 = vmatpush1.msra.mxu0 0.0
    %1025 = vmatprep.subr.mxu0 0.0
    %1026 = vmatpush1.msra.mxu0 0.0
    %1027 = vmatprep.subr.mxu0 0.0
    %1028 = vmatpush1.msra.mxu0 0.0
    %1029 = vmatprep.subr.mxu0 0.0
    %1030 = vmatpush1.msra.mxu0 0.0
    %1031 = vmatprep.subr.mxu0 0.0
    %1032 = vmatpush1.msra.mxu0 0.0
    %1033 = vmatprep.subr.mxu0 0.0
    %1034 = vmatpush1.msra.mxu0 0.0
    %1035 = vmatprep.subr.mxu0 0.0
    %1036 = vmatpush1.msra.mxu0 0.0
    %1037 = vmatprep.subr.mxu0 0.0
    %1038 = vmatpush1.msra.mxu0 0.0
    %1039 = vmatprep.subr.mxu0 0.0
    %1040 = vmatpush1.msra.mxu0 0.0
    %1041 = vmatprep.subr.mxu0 0.0
    %1042 = vmatpush1.msra.mxu0 0.0
    %1043 = vmatprep.subr.mxu0 0.0
    %1044 = vmatpush1.msra.mxu0 0.0
    %1045 = vmatprep.subr.mxu0 0.0
    %1046 = vmatpush1.msra.mxu0 0.0
    %1047 = vmatprep.mubr.f32.mxu0 0.0
    %1048 = vmatmul.mubr.f32.gmra.mrb[0].mxu0 %v981
    %v1049 = vpop.f32.mrb[0].mxu0
    %v1050 = vadd.f32 0.0, %v1049
    %v1051 = vpop.f32.mrb[0].mxu0
    %1052 = vdwg.mxu0
    %v1054 = vsel %vm979, 1.0, 0
    %1056 = vmatprep.subr.mxu0 0.0
    %1057 = vmatpush1.msra.mxu0 %v978
    %1058 = vmatprep.subr.mxu0 0.0
    %1059 = vmatpush1.msra.mxu0 0.0
    %1060 = vmatprep.subr.mxu0 0.0
    %1061 = vmatpush1.msra.mxu0 0.0
    %1062 = vmatprep.subr.mxu0 0.0
    %1063 = vmatpush1.msra.mxu0 0.0
    %1064 = vmatprep.subr.mxu0 0.0
    %1065 = vmatpush1.msra.mxu0 0.0
    %1066 = vmatprep.subr.mxu0 0.0
    %1067 = vmatpush1.msra.mxu0 0.0
    %1068 = vmatprep.subr.mxu0 0.0
    %1069 = vmatpush1.msra.mxu0 0.0
    %1070 = vmatprep.subr.mxu0 0.0
    %1071 = vmatpush1.msra.mxu0 0.0
    %1072 = vmatprep.subr.mxu0 0.0
    %1073 = vmatpush1.msra.mxu0 0.0
    %1074 = vmatprep.subr.mxu0 0.0
    %1075 = vmatpush1.msra.mxu0 0.0
    %1076 = vmatprep.subr.mxu0 0.0
    %1077 = vmatpush1.msra.mxu0 0.0
    %1078 = vmatprep.subr.mxu0 0.0
    %1079 = vmatpush1.msra.mxu0 0.0
    %1080 = vmatprep.subr.mxu0 0.0
    %1081 = vmatpush1.msra.mxu0 0.0
    %1082 = vmatprep.subr.mxu0 0.0
    %1083 = vmatpush1.msra.mxu0 0.0
    %1084 = vmatprep.subr.mxu0 0.0
    %1085 = vmatpush1.msra.mxu0 0.0
    %1086 = vmatprep.subr.mxu0 0.0
    %1087 = vmatpush1.msra.mxu0 0.0
    %1088 = vmatprep.subr.mxu0 0.0
    %1089 = vmatpush1.msra.mxu0 0.0
    %1090 = vmatprep.subr.mxu0 0.0
    %1091 = vmatpush1.msra.mxu0 0.0
    %1092 = vmatprep.subr.mxu0 0.0
    %1093 = vmatpush1.msra.mxu0 0.0
    %1094 = vmatprep.subr.mxu0 0.0
    %1095 = vmatpush1.msra.mxu0 0.0
    %1096 = vmatprep.subr.mxu0 0.0
    %1097 = vmatpush1.msra.mxu0 0.0
    %1098 = vmatprep.subr.mxu0 0.0
    %1099 = vmatpush1.msra.mxu0 0.0
    %1100 = vmatprep.subr.mxu0 0.0
    %1101 = vmatpush1.msra.mxu0 0.0
    %1102 = vmatprep.subr.mxu0 0.0
    %1103 = vmatpush1.msra.mxu0 0.0
    %1104 = vmatprep.subr.mxu0 0.0
    %1105 = vmatpush1.msra.mxu0 0.0
    %1106 = vmatprep.subr.mxu0 0.0
    %1107 = vmatpush1.msra.mxu0 0.0
    %1108 = vmatprep.subr.mxu0 0.0
    %1109 = vmatpush1.msra.mxu0 0.0
    %1110 = vmatprep.subr.mxu0 0.0
    %1111 = vmatpush1.msra.mxu0 0.0
    %1112 = vmatprep.subr.mxu0 0.0
    %1113 = vmatpush1.msra.mxu0 0.0
    %1114 = vmatprep.subr.mxu0 0.0
    %1115 = vmatpush1.msra.mxu0 0.0
    %1116 = vmatprep.subr.mxu0 0.0
    %1117 = vmatpush1.msra.mxu0 0.0
    %1118 = vmatprep.subr.mxu0 0.0
    %1119 = vmatpush1.msra.mxu0 0.0
    %1120 = vmatprep.mubr.f32.mxu0 0.0
    %1121 = vmatmul.mubr.f32.gmra.mrb[0].mxu0 %v1054
    %v1122 = vpop.f32.mrb[0].mxu0
    %v1123 = vadd.f32 0.0, %v1122
    %v1124 = vpop.f32.mrb[0].mxu0
    %1125 = vdwg.mxu0
    %v1127 = vsel %vm979, %v976, 0
    %1129 = vmatprep.subr.mxu0 0.0
    %1130 = vmatpush1.msra.mxu0 1.0
    %1131 = vmatprep.subr.mxu0 0.0
    %1132 = vmatpush1.msra.mxu0 0.0
    %1133 = vmatprep.subr.mxu0 0.0
    %1134 = vmatpush1.msra.mxu0 0.0
    %1135 = vmatprep.subr.mxu0 0.0
    %1136 = vmatpush1.msra.mxu0 0.0
    %1137 = vmatprep.subr.mxu0 0.0
    %1138 = vmatpush1.msra.mxu0 0.0
    %1139 = vmatprep.subr.mxu0 0.0
    %1140 = vmatpush1.msra.mxu0 0.0
    %1141 = vmatprep.subr.mxu0 0.0
    %1142 = vmatpush1.msra.mxu0 0.0
    %1143 = vmatprep.subr.mxu0 0.0
    %1144 = vmatpush1.msra.mxu0 0.0
    %1145 = vmatprep.subr.mxu0 0.0
    %1146 = vmatpush1.msra.mxu0 0.0
    %1147 = vmatprep.subr.mxu0 0.0
    %1148 = vmatpush1.msra.mxu0 0.0
    %1149 = vmatprep.subr.mxu0 0.0
    %1150 = vmatpush1.msra.mxu0 0.0
    %1151 = vmatprep.subr.mxu0 0.0
    %1152 = vmatpush1.msra.mxu0 0.0
    %1153 = vmatprep.subr.mxu0 0.0
    %1154 = vmatpush1.msra.mxu0 0.0
    %1155 = vmatprep.subr.mxu0 0.0
    %1156 = vmatpush1.msra.mxu0 0.0
    %1157 = vmatprep.subr.mxu0 0.0
    %1158 = vmatpush1.msra.mxu0 0.0
    %1159 = vmatprep.subr.mxu0 0.0
    %1160 = vmatpush1.msra.mxu0 0.0
    %1161 = vmatprep.subr.mxu0 0.0
    %1162 = vmatpush1.msra.mxu0 0.0
    %1163 = vmatprep.subr.mxu0 0.0
    %1164 = vmatpush1.msra.mxu0 0.0
    %1165 = vmatprep.subr.mxu0 0.0
    %1166 = vmatpush1.msra.mxu0 0.0
    %1167 = vmatprep.subr.mxu0 0.0
    %1168 = vmatpush1.msra.mxu0 0.0
    %1169 = vmatprep.subr.mxu0 0.0
    %1170 = vmatpush1.msra.mxu0 0.0
    %1171 = vmatprep.subr.mxu0 0.0
    %1172 = vmatpush1.msra.mxu0 0.0
    %1173 = vmatprep.subr.mxu0 0.0
    %1174 = vmatpush1.msra.mxu0 0.0
    %1175 = vmatprep.subr.mxu0 0.0
    %1176 = vmatpush1.msra.mxu0 0.0
    %1177 = vmatprep.subr.mxu0 0.0
    %1178 = vmatpush1.msra.mxu0 0.0
    %1179 = vmatprep.subr.mxu0 0.0
    %1180 = vmatpush1.msra.mxu0 0.0
    %1181 = vmatprep.subr.mxu0 0.0
    %1182 = vmatpush1.msra.mxu0 0.0
    %1183 = vmatprep.subr.mxu0 0.0
    %1184 = vmatpush1.msra.mxu0 0.0
    %1185 = vmatprep.subr.mxu0 0.0
    %1186 = vmatpush1.msra.mxu0 0.0
    %1187 = vmatprep.subr.mxu0 0.0
    %1188 = vmatpush1.msra.mxu0 0.0
    %1189 = vmatprep.subr.mxu0 0.0
    %1190 = vmatpush1.msra.mxu0 0.0
    %1191 = vmatprep.subr.mxu0 0.0
    %1192 = vmatpush1.msra.mxu0 0.0
    %1193 = vmatprep.mubr.f32.mxu0 0.0
    %1194 = vmatmul.mubr.f32.gmra.mrb[0].mxu0 %v1127
    %v1195 = vpop.f32.mrb[0].mxu0
    %v1196 = vadd.f32 0.0, %v1195
    %v1197 = vpop.f32.mrb[0].mxu0
    %1198 = vdwg.mxu0
    %1199 = vmatprep.subr.mxu0 0.0
    %1200 = vmatpush1.msra.mxu0 %v976
    %1201 = vmatprep.subr.mxu0 0.0
    %1202 = vmatpush1.msra.mxu0 0.0
    %1203 = vmatprep.subr.mxu0 0.0
    %1204 = vmatpush1.msra.mxu0 0.0
    %1205 = vmatprep.subr.mxu0 0.0
    %1206 = vmatpush1.msra.mxu0 0.0
    %1207 = vmatprep.subr.mxu0 0.0
    %1208 = vmatpush1.msra.mxu0 0.0
    %1209 = vmatprep.subr.mxu0 0.0
    %1210 = vmatpush1.msra.mxu0 0.0
    %1211 = vmatprep.subr.mxu0 0.0
    %1212 = vmatpush1.msra.mxu0 0.0
    %1213 = vmatprep.subr.mxu0 0.0
    %1214 = vmatpush1.msra.mxu0 0.0
    %1215 = vmatprep.subr.mxu0 0.0
    %1216 = vmatpush1.msra.mxu0 0.0
    %1217 = vmatprep.subr.mxu0 0.0
    %1218 = vmatpush1.msra.mxu0 0.0
    %1219 = vmatprep.subr.mxu0 0.0
    %1220 = vmatpush1.msra.mxu0 0.0
    %1221 = vmatprep.subr.mxu0 0.0
    %1222 = vmatpush1.msra.mxu0 0.0
    %1223 = vmatprep.subr.mxu0 0.0
    %1224 = vmatpush1.msra.mxu0 0.0
    %1225 = vmatprep.subr.mxu0 0.0
    %1226 = vmatpush1.msra.mxu0 0.0
    %1227 = vmatprep.subr.mxu0 0.0
    %1228 = vmatpush1.msra.mxu0 0.0
    %1229 = vmatprep.subr.mxu0 0.0
    %1230 = vmatpush1.msra.mxu0 0.0
    %1231 = vmatprep.subr.mxu0 0.0
    %1232 = vmatpush1.msra.mxu0 0.0
    %1233 = vmatprep.subr.mxu0 0.0
    %1234 = vmatpush1.msra.mxu0 0.0
    %1235 = vmatprep.subr.mxu0 0.0
    %1236 = vmatpush1.msra.mxu0 0.0
    %1237 = vmatprep.subr.mxu0 0.0
    %1238 = vmatpush1.msra.mxu0 0.0
    %1239 = vmatprep.subr.mxu0 0.0
    %1240 = vmatpush1.msra.mxu0 0.0
    %1241 = vmatprep.subr.mxu0 0.0
    %1242 = vmatpush1.msra.mxu0 0.0
    %1243 = vmatprep.subr.mxu0 0.0
    %1244 = vmatpush1.msra.mxu0 0.0
    %1245 = vmatprep.subr.mxu0 0.0
    %1246 = vmatpush1.msra.mxu0 0.0
    %1247 = vmatprep.subr.mxu0 0.0
    %1248 = vmatpush1.msra.mxu0 0.0
    %1249 = vmatprep.subr.mxu0 0.0
    %1250 = vmatpush1.msra.mxu0 0.0
    %1251 = vmatprep.subr.mxu0 0.0
    %1252 = vmatpush1.msra.mxu0 0.0
    %1253 = vmatprep.subr.mxu0 0.0
    %1254 = vmatpush1.msra.mxu0 0.0
    %1255 = vmatprep.subr.mxu0 0.0
    %1256 = vmatpush1.msra.mxu0 0.0
    %1257 = vmatprep.subr.mxu0 0.0
    %1258 = vmatpush1.msra.mxu0 0.0
    %1259 = vmatprep.subr.mxu0 0.0
    %1260 = vmatpush1.msra.mxu0 0.0
    %1261 = vmatprep.subr.mxu0 0.0
    %1262 = vmatpush1.msra.mxu0 0.0
    %1263 = vmatprep.mubr.f32.mxu0 0.0
    %1264 = vmatmul.mubr.f32.gmra.mrb[0].mxu0 %v1054
    %v1265 = vpop.f32.mrb[0].mxu0
    %v1266 = vadd.f32 0.0, %v1265
    %v1267 = vpop.f32.mrb[0].mxu0
    %1268 = vdwg.mxu0
    %v1269 = vlog2.pop %v1050
    %v1270 = vmul.f32 %v1269, 0.6931472
    %v1271 = vlog2.pop %v1123
    %v1272 = vmul.f32 %v1271, 0.6931472
    %vm1273 = vcmask 7168
    %v1274 = vsel %vm1273, %v1270, 0.0
    %v1275 = vrot.slane %v1274, 4
    %v1276 = vadd.f32 %v1274, %v1275
    %v1277 = vrot.slane %v1276, 2
    %v1278 = vadd.f32 %v1276, %v1277
    %v1279 = vrot.slane %v1278, 1
    %v1280 = vadd.f32 %v1278, %v1279
    %vm1281 = vcmask 57344
    %v1282 = vsel %vm1281, %v1272, 0.0
    %1283 = vadd.xlane.f32.xlu0 %v1282
    %v1284 = vpop.xlane.xlu0 %1283
    %v1285 = vadd.f32 %v1280, %v1284
    %v1286 = vsel %vm1273, %v1196, 0.0
    %v1287 = vrot.slane %v1286, 4
    %v1288 = vadd.f32 %v1286, %v1287
    %v1289 = vrot.slane %v1288, 2
    %v1290 = vadd.f32 %v1288, %v1289
    %v1291 = vrot.slane %v1290, 1
    %v1292 = vadd.f32 %v1290, %v1291
    %v1293 = vmul.f32 %v1292, 2.0
    %v1294 = vsub.f32 %v1285, %v1293
    %v1295 = vmul.f32 %v1294, 0.0625
    %v1296 = vsel %vm979, %v968, -inf
    %1297 = vmax.xlane.f32.xlu0 %v1296
    %v1298 = vpop.xlane.xlu0 %1297
    %v1299 = vrot.slane %v1296, 4
    %v1300 = vmax.f32 %v1296, %v1299
    %v1301 = vrot.slane %v1300, 2
    %v1302 = vmax.f32 %v1300, %v1301
    %v1303 = vrot.slane %v1302, 1
    %v1304 = vmax.f32 %v1302, %v1303
    %vm1305 = vcmp.ge.f32.partialorder %v1196, %v1298
    %v1306 = vsel %vm1305, 1, 0
    %v1307 = vcvt.s32.f32 %v1306
    %v1308 = vsel %vm1273, %v1307, 0.0
    %v1309 = vrot.slane %v1308, 4
    %v1310 = vadd.f32 %v1308, %v1309
    %v1311 = vrot.slane %v1310, 2
    %v1312 = vadd.f32 %v1310, %v1311
    %v1313 = vrot.slane %v1312, 1
    %v1314 = vadd.f32 %v1312, %v1313
    %vm1315 = vcmp.ge.f32.partialorder %v1266, %v1304
    %v1316 = vsel %vm1315, 1, 0
    %v1317 = vcvt.s32.f32 %v1316
    %v1318 = vsel %vm1281, %v1317, 0.0
    %1319 = vadd.xlane.f32.xlu0 %v1318
    %v1320 = vpop.xlane.xlu0 %1319
    %v1321 = vadd.f32 %v1314, %v1320
    %v1322 = vmul.f32 %v1321, 0.0625
    %vm1323 = vcmp.eq.s32.totalorder %v974, 0
    %vm1324 = vcmp.eq.s32.totalorder %v974, 1
    %1326 = vset.pattern.permute.xlu0 0
    %1327 = vperm.xlu0 %1326, %v1322
    %v1328 = vpop.permute.xlu0 %1327
    %v1330 = vsel %vm1324, %v1328, 0.0
    %1332 = vset.pattern.permute.xlu0 0
    %1333 = vperm.xlu0 %1332, %v1295
    %v1334 = vpop.permute.xlu0 %1333
    %v1336 = vsel %vm1323, %v1334, %v1330
    %1337 = vst [vmem:[#allocation13] sm:$0x1] %v1336
    // Predicated region
    $region66: #{tpu_custom_call.1} parent=1 // pred_check
      _
    $region67: #{tpu_custom_call.1} parent=1 // pred_check_branch
      %1339 = sbr.rel (0) target = $region69
    $region68: #{tpu_custom_call.1} parent=1 // pred_region
      %s1341 = ssub.s32 16, 16
      %1342 = vsyncadd [#allocation4], %s1341
      %s1344 = sshll.u32 [#allocation13], 4
      %s1345 = int_to_ptr.vmem [resolvable:$true] %s1344
      %1347 = dma.vmem_to_hbm [thread:$0]  %s1345, 16, %s10, [#allocation4]
    $region69: #{tpu_custom_call.1} parent=1 // pred_fallthru
      _
    // Predicated region
    $region70: #{tpu_custom_call.1} parent=1 // pred_check
      _
    $region71: #{tpu_custom_call.1} parent=1 // pred_check_branch
      %1349 = sbr.rel (0) target = $region73
    $region72: #{tpu_custom_call.1} parent=1 // pred_region
      %1350 = dma.done [#allocation4], 16
    $region73: #{tpu_custom_call.1} parent=1 // pred_fallthru
      _
    %1351 = vsyncpa [#allocation3], 1
    %1352 = vsyncpa [#allocation6], 1
    %1353 = vsyncpa [#allocation9], 1
    %1354 = vsyncpa [#allocation12], 1
    %1355 = vsyncpa [#allocation4], 1

</llo_original>
